<compile_context>
chip_gen: v7x
topology: tpu7x:2x2x1
jax: 0.10.0
libtpu: 0.0.40
codegen_flags: <defaults>
</compile_context>

<pallas_src>
import math

import jax
import jax.numpy as jnp
from jax.experimental import pallas as pl
from jax.experimental.pallas import tpu as pltpu

LANE = 128      # pad all feature dims AND the node dim to the TPU lane width


# ----------------------------------------------------------------------------
# in-kernel helpers (traced into the fused kernel bodies)
# ----------------------------------------------------------------------------
def _dense(x, w_ref, b_ref, *, relu):
    """y = (relu)(x @ W + b): bf16 MXU inputs, f32 accumulation + f32 epilogue."""
    y = jnp.dot(x.astype(jnp.bfloat16), w_ref[...],
                preferred_element_type=jnp.float32)
    y = y + b_ref[...]
    if relu:
        y = jnp.maximum(y, 0.0)
    return y


def _cheb_basis(at_bf16, x0):
    """DGL ChebConv (k=3) basis -> bf16 [X0 | X1 | X2] of shape (N, 3F).

    Scalars are pre-folded into A_tilde = -re*Ahat + (re-1)*I, so
        X1 = A_tilde @ X0
        X2 = 2 * (A_tilde @ X1) - X0
    Each term is cast to bf16 before the concat (no f32 (N, 3F) temporary).
    """
    x0b = x0.astype(jnp.bfloat16)
    x1 = jnp.dot(at_bf16, x0b, preferred_element_type=jnp.float32)
    x1b = x1.astype(jnp.bfloat16)
    ax1 = jnp.dot(at_bf16, x1b, preferred_element_type=jnp.float32)
    x2b = (2.0 * ax1 - x0).astype(jnp.bfloat16)
    return jnp.concatenate([x0b, x1b, x2b], axis=-1)


# ----------------------------------------------------------------------------
# fused forward kernels (one pallas_call == entire forward pass)
# ----------------------------------------------------------------------------
def _gad_seq_kernel(a_ref, x_ref,
                    w1_ref, b1_ref, w2_ref, b2_ref,
                    wc1_ref, bc1_ref, wc2_ref, bc2_ref,
                    w3_ref, b3_ref, w4_ref, b4_ref, o_ref):
    """dataset != 'amazon': linear -> linear2 -> conv1 -> conv2 -> linear3 -> linear4."""
    at = a_ref[...]

    h = _dense(x_ref[...], w1_ref, b1_ref, relu=True)             # linear  + ReLU
    h = _dense(h, w2_ref, b2_ref, relu=True)                       # linear2 + ReLU

    xs = _cheb_basis(at, h)                                         # conv1 (+ default relu)
    h = jnp.maximum(jnp.dot(xs, wc1_ref[...],
                            preferred_element_type=jnp.float32) + bc1_ref[...], 0.0)
    xs = _cheb_basis(at, h)                                         # conv2 (+ default relu)
    h = jnp.maximum(jnp.dot(xs, wc2_ref[...],
                            preferred_element_type=jnp.float32) + bc2_ref[...], 0.0)

    h = _dense(h, w3_ref, b3_ref, relu=True)                        # linear3 + ReLU
    o_ref[...] = _dense(h, w4_ref, b4_ref, relu=False).astype(o_ref.dtype)  # linear4


def _gad_amazon_kernel(a_ref, x_ref,
                       w1_ref, b1_ref, w2_ref, b2_ref,
                       wc12_ref, bc12_ref,
                       w3a_ref, b3a_ref, w4_ref, b4_ref, o_ref):
    """dataset == 'amazon': conv1/conv2 share X0/X1/X2 -> one fused cheb matmul."""
    at = a_ref[...]

    h = _dense(x_ref[...], w1_ref, b1_ref, relu=True)              # linear  + ReLU
    h = _dense(h, w2_ref, b2_ref, relu=True)                        # linear2 + ReLU

    xs = _cheb_basis(at, h)                                          # shared basis
    # wc12 = [Wc1 | Wc2] along the output axis -> (N, 2F) = [relu(h0) | relu(h1)]
    h01 = jnp.maximum(jnp.dot(xs, wc12_ref[...],
                              preferred_element_type=jnp.float32) + bc12_ref[...], 0.0)

    h = _dense(h01, w3a_ref, b3a_ref, relu=True)                     # linear3_A + ReLU
    o_ref[...] = _dense(h, w4_ref, b4_ref, relu=False).astype(o_ref.dtype)  # linear4


# ----------------------------------------------------------------------------
# pallas_call wrapper + parameter packing (padding / bf16 cast, done once)
# ----------------------------------------------------------------------------
_VMEM = pl.BlockSpec(memory_space=pltpu.MemorySpace.VMEM)


def _round_up(x, m):
    return (x + m - 1) // m * m


def _pad2d(x, rows, cols):
    return jnp.zeros((rows, cols), x.dtype).at[:x.shape[0], :x.shape[1]].set(x)


def _pad_blocked_rows(w, blk, blk_pad, cols_pad):
    """Pad (k*blk, Fout) -> (k*blk_pad, cols_pad); each blk-row block lands at stride blk_pad."""
    k = w.shape[0] // blk
    out = jnp.zeros((k * blk_pad, cols_pad), w.dtype)
    for i in range(k):
        out = out.at[i * blk_pad:i * blk_pad + blk, :w.shape[1]].set(
            w[i * blk:(i + 1) * blk])
    return out


def _vmem_limit_bytes():
    """Generation-aware VMEM cap: physical capacity minus headroom, clamped."""
    try:
        cap = int(pltpu.get_tpu_info().vmem_capacity_bytes)
    except Exception:                                  # conservative (v7x physical)
        cap = 64 * 1024 * 1024
    return int(max(32 << 20, min(cap - (20 << 20), 110 << 20)))


def pack_params(p, in_feats, h_feats, num_classes, k):
    """Pad every weight to 128-lane / 128-sublane blocks and cast matmul weights to bf16."""
    del k
    fi = _round_up(in_feats, LANE)
    hp = _round_up(h_feats, LANE)
    cp = _round_up(num_classes, LANE)
    bf = jnp.bfloat16
    q = {}
    q["w1"] = _pad2d(p["w1"], fi, hp).astype(bf)
    q["b1"] = _pad2d(p["b1"], 1, hp)
    q["w2"] = _pad2d(p["w2"], hp, hp).astype(bf)
    q["b2"] = _pad2d(p["b2"], 1, hp)
    # ChebConv weights: K axis is [X0|X1|X2] with each block padded to hp.
    q["wc1"] = _pad_blocked_rows(p["wc1"], h_feats, hp, hp).astype(bf)
    q["bc1"] = _pad2d(p["bc1"], 1, hp)
    q["wc2"] = _pad_blocked_rows(p["wc2"], h_feats, hp, hp).astype(bf)
    q["bc2"] = _pad2d(p["bc2"], 1, hp)
    # amazon branch: fold conv1|conv2 into one weight along the output axis.
    q["wc12"] = jnp.concatenate([q["wc1"], q["wc2"]], axis=1)
    q["bc12"] = jnp.concatenate([q["bc1"], q["bc2"]], axis=1)
    q["w3"] = _pad2d(p["w3"], hp, hp).astype(bf)
    q["b3"] = _pad2d(p["b3"], 1, hp)
    # linear3_A: K axis is [h0|h1] with each block padded to hp.
    q["w3a"] = _pad_blocked_rows(p["w3a"], h_feats, hp, hp).astype(bf)
    q["b3a"] = _pad2d(p["b3a"], 1, hp)
    q["w4"] = _pad2d(p["w4"], hp, cp).astype(bf)
    q["b4"] = _pad2d(p["b4"], 1, cp)
    return q


def pack_graph(ahat, lambda_max):
    """Once-per-graph precompute: A_tilde = -re*Ahat + (re-1)*I, formed in f32,
    zero-padded to a 128-multiple node dim, then cast to bf16 (so the diagonal
    term rounds consistently with the off-diagonal entries)."""
    n = ahat.shape[0]
    n_pad = _round_up(n, LANE)
    re = 2.0 / jnp.asarray(lambda_max, jnp.float32)
    a_tilde = (-re) * ahat.astype(jnp.float32) \
        + (re - 1.0) * jnp.eye(n, dtype=jnp.float32)
    return _pad2d(a_tilde, n_pad, n_pad).astype(jnp.bfloat16)


def chebconv_gad_forward(packed, a_tilde_pad, in_feat, dataset, *, num_classes):
    n, fin = in_feat.shape
    n_pad = a_tilde_pad.shape[0]
    fin_pad = _round_up(fin, LANE)
    cp = packed["b4"].shape[1]

    x = _pad2d(in_feat, n_pad, fin_pad).astype(jnp.bfloat16)

    if dataset == "amazon":
        kern = _gad_amazon_kernel
        weights = (packed["w1"], packed["b1"], packed["w2"], packed["b2"],
                   packed["wc12"], packed["bc12"],
                   packed["w3a"], packed["b3a"], packed["w4"], packed["b4"])
    else:
        kern = _gad_seq_kernel
        weights = (packed["w1"], packed["b1"], packed["w2"], packed["b2"],
                   packed["wc1"], packed["bc1"], packed["wc2"], packed["bc2"],
                   packed["w3"], packed["b3"], packed["w4"], packed["b4"])

    out_pad = pl.pallas_call(
        kern,
        out_shape=jax.ShapeDtypeStruct((n_pad, cp), jnp.float32),
        in_specs=[_VMEM] * (2 + len(weights)),
        out_specs=_VMEM,
        compiler_params=pltpu.CompilerParams(
            vmem_limit_bytes=_vmem_limit_bytes()),
    )(a_tilde_pad, x, *weights)

    return out_pad[:n, :num_classes]


# ----------------------------------------------------------------------------
# pure-JAX reference (unpadded, f32) for correctness checking
# ----------------------------------------------------------------------------
def _ref_forward(p, ahat, lambda_max, x, dataset):
    re = 2.0 / lambda_max

    def cheb(h, w, b):
        x0 = h
        x1 = -re * (ahat @ x0) + (re - 1.0) * x0
        x2 = -2.0 * re * (ahat @ x1) + 2.0 * (re - 1.0) * x1 - x0
        xs = jnp.concatenate([x0, x1, x2], axis=-1)
        return jnp.maximum(xs @ w + b, 0.0)           # DGL ChebConv default act

    h = jnp.maximum(x @ p["w1"] + p["b1"], 0.0)
    h = jnp.maximum(h @ p["w2"] + p["b2"], 0.0)
    if dataset == "amazon":
        h0 = cheb(h, p["wc1"], p["bc1"])
        h1 = cheb(h, p["wc2"], p["bc2"])
        h0 = jnp.maximum(h0, 0.0)                     # extra (idempotent) relu
        hf = jnp.concatenate([h0, h1], axis=-1)
        h = jnp.maximum(hf @ p["w3a"] + p["b3a"], 0.0)
        return h @ p["w4"] + p["b4"]
    h = cheb(h, p["wc1"], p["bc1"])
    h = cheb(h, p["wc2"], p["bc2"])
    h = jnp.maximum(h @ p["w3"] + p["b3"], 0.0)
    return h @ p["w4"] + p["b4"]


# ----------------------------------------------------------------------------
# deterministic parameter / graph construction (glue, plain JAX)
# ----------------------------------------------------------------------------
def _init_linear(key, f_in, f_out):
    kw, kb = jax.random.split(key)
    bound = 1.0 / math.sqrt(f_in)
    w = jax.random.uniform(kw, (f_in, f_out), jnp.float32, -bound, bound)
    b = jax.random.uniform(kb, (1, f_out), jnp.float32, -bound, bound)
    return w, b


def make_params(key, in_feats, h_feats, num_classes, k):
    keys = jax.random.split(key, 7)
    p = {}
    p["w1"], p["b1"] = _init_linear(keys[0], in_feats, h_feats)          # linear
    p["w2"], p["b2"] = _init_linear(keys[1], h_feats, h_feats)           # linear2
    p["w3"], p["b3"] = _init_linear(keys[2], h_feats, h_feats)           # linear3
    p["w3a"], p["b3a"] = _init_linear(keys[3], 2 * h_feats, h_feats)     # linear3_A
    p["w4"], p["b4"] = _init_linear(keys[4], h_feats, num_classes)       # linear4
    p["wc1"], p["bc1"] = _init_linear(keys[5], k * h_feats, h_feats)     # conv1.linear
    p["wc2"], p["bc2"] = _init_linear(keys[6], k * h_feats, h_feats)     # conv2.linear
    return p


def make_graph(key, n):
    """Random undirected graph -> dense normalized adjacency + lambda_max."""
    a = (jax.random.uniform(key, (n, n)) < 0.15).astype(jnp.float32)
    a = jnp.maximum(a, a.T)                          # symmetrize
    a = a * (1.0 - jnp.eye(n, dtype=jnp.float32))    # no self loops
    deg = jnp.maximum(a.sum(axis=1), 1.0)            # in_degrees().clamp(min=1)
    d_inv_sqrt = deg ** -0.5
    ahat = d_inv_sqrt[:, None] * a * d_inv_sqrt[None, :]
    lap = jnp.eye(n, dtype=jnp.float32) - ahat
    lambda_max = jnp.max(jnp.linalg.eigvalsh(lap))   # dgl.laplacian_lambda_max
    return ahat, lambda_max


# ----------------------------------------------------------------------------
if __name__ == "__main__":
    N = 64            # number of graph nodes
    IN_FEATS = 16
    H_FEATS = 32
    NUM_CLASSES = 2
    K = 3

    root = jax.random.PRNGKey(0)
    k_graph, k_feat, k_param = jax.random.split(root, 3)

    ahat, lambda_max = make_graph(k_graph, N)
    a_tilde_pad = pack_graph(ahat, lambda_max)       # once-per-graph precompute

    in_feat = jax.random.normal(k_feat, (N, IN_FEATS), jnp.float32)
    params = make_params(k_param, IN_FEATS, H_FEATS, NUM_CLASSES, K)
    packed = pack_params(params, IN_FEATS, H_FEATS, NUM_CLASSES, K)

    for dataset in ("yelp", "amazon"):
        out = chebconv_gad_forward(packed, a_tilde_pad, in_feat, dataset,
                                   num_classes=NUM_CLASSES)
        out = jax.block_until_ready(out)
        assert out.shape == (N, NUM_CLASSES)
        ref = _ref_forward(params, ahat, lambda_max, in_feat, dataset)
        err = float(jnp.max(jnp.abs(out - ref)))
        scale = float(jnp.max(jnp.abs(ref))) + 1e-6
        assert err <= 0.05 * scale + 0.05, (
            f"{dataset}: max abs err {err} vs scale {scale}")

    print("KERNEL_OK")
</pallas_src>

<mosaic_0001>
module attributes {stable_mosaic.version = 11 : i64} {
  func.func @_gad_seq_kernel(%arg0: memref<128x128xbf16, #tpu.memory_space<vmem>>, %arg1: memref<128x128xbf16, #tpu.memory_space<vmem>>, %arg2: memref<128x128xbf16, #tpu.memory_space<vmem>>, %arg3: memref<1x128xf32, #tpu.memory_space<vmem>>, %arg4: memref<128x128xbf16, #tpu.memory_space<vmem>>, %arg5: memref<1x128xf32, #tpu.memory_space<vmem>>, %arg6: memref<384x128xbf16, #tpu.memory_space<vmem>>, %arg7: memref<1x128xf32, #tpu.memory_space<vmem>>, %arg8: memref<384x128xbf16, #tpu.memory_space<vmem>>, %arg9: memref<1x128xf32, #tpu.memory_space<vmem>>, %arg10: memref<128x128xbf16, #tpu.memory_space<vmem>>, %arg11: memref<1x128xf32, #tpu.memory_space<vmem>>, %arg12: memref<128x128xbf16, #tpu.memory_space<vmem>>, %arg13: memref<1x128xf32, #tpu.memory_space<vmem>>, %arg14: memref<128x128xf32, #tpu.memory_space<vmem>>) attributes {dimension_semantics = [], scalar_prefetch = 0 : i64, scratch_operands = 0 : i64, tpu.core_type = #tpu.core_type<tc>} {
    %c0 = arith.constant 0 : index
    %c0_0 = arith.constant 0 : index
    %0 = vector.load %arg0[%c0, %c0_0] : memref<128x128xbf16, #tpu.memory_space<vmem>>, vector<128x128xbf16>
    %c0_1 = arith.constant 0 : index
    %c0_2 = arith.constant 0 : index
    %1 = vector.load %arg1[%c0_1, %c0_2] : memref<128x128xbf16, #tpu.memory_space<vmem>>, vector<128x128xbf16>
    %c0_3 = arith.constant 0 : index
    %c0_4 = arith.constant 0 : index
    %2 = vector.load %arg2[%c0_3, %c0_4] : memref<128x128xbf16, #tpu.memory_space<vmem>>, vector<128x128xbf16>
    %cst = arith.constant dense<0.000000e+00> : vector<128x128xf32>
    %3 = tpu.matmul %1, %2, %cst {dimension_numbers = #tpu.dot_dimension_numbers<[1], [0], [0], [1], [0, 0, 1, 1], [], []>} : vector<128x128xbf16>, vector<128x128xbf16>, vector<128x128xf32> -> vector<128x128xf32>
    %c0_5 = arith.constant 0 : index
    %c0_6 = arith.constant 0 : index
    %4 = vector.load %arg3[%c0_5, %c0_6] : memref<1x128xf32, #tpu.memory_space<vmem>>, vector<1x128xf32>
    %5 = vector.broadcast %4 : vector<1x128xf32> to vector<128x128xf32>
    %6 = arith.addf %3, %5 : vector<128x128xf32>
    %cst_7 = arith.constant 0.000000e+00 : f32
    %7 = vector.broadcast %cst_7 : f32 to vector<128x128xf32>
    %8 = arith.maximumf %6, %7 : vector<128x128xf32>
    %9 = arith.truncf %8 : vector<128x128xf32> to vector<128x128xbf16>
    %c0_8 = arith.constant 0 : index
    %c0_9 = arith.constant 0 : index
    %10 = vector.load %arg4[%c0_8, %c0_9] : memref<128x128xbf16, #tpu.memory_space<vmem>>, vector<128x128xbf16>
    %cst_10 = arith.constant dense<0.000000e+00> : vector<128x128xf32>
    %11 = tpu.matmul %9, %10, %cst_10 {dimension_numbers = #tpu.dot_dimension_numbers<[1], [0], [0], [1], [0, 0, 1, 1], [], []>} : vector<128x128xbf16>, vector<128x128xbf16>, vector<128x128xf32> -> vector<128x128xf32>
    %c0_11 = arith.constant 0 : index
    %c0_12 = arith.constant 0 : index
    %12 = vector.load %arg5[%c0_11, %c0_12] : memref<1x128xf32, #tpu.memory_space<vmem>>, vector<1x128xf32>
    %13 = vector.broadcast %12 : vector<1x128xf32> to vector<128x128xf32>
    %14 = arith.addf %11, %13 : vector<128x128xf32>
    %cst_13 = arith.constant 0.000000e+00 : f32
    %15 = vector.broadcast %cst_13 : f32 to vector<128x128xf32>
    %16 = arith.maximumf %14, %15 : vector<128x128xf32>
    %17 = arith.truncf %16 : vector<128x128xf32> to vector<128x128xbf16>
    %cst_14 = arith.constant dense<0.000000e+00> : vector<128x128xf32>
    %18 = tpu.matmul %0, %17, %cst_14 {dimension_numbers = #tpu.dot_dimension_numbers<[1], [0], [0], [1], [0, 0, 1, 1], [], []>} : vector<128x128xbf16>, vector<128x128xbf16>, vector<128x128xf32> -> vector<128x128xf32>
    %19 = arith.truncf %18 : vector<128x128xf32> to vector<128x128xbf16>
    %cst_15 = arith.constant dense<0.000000e+00> : vector<128x128xf32>
    %20 = tpu.matmul %0, %19, %cst_15 {dimension_numbers = #tpu.dot_dimension_numbers<[1], [0], [0], [1], [0, 0, 1, 1], [], []>} : vector<128x128xbf16>, vector<128x128xbf16>, vector<128x128xf32> -> vector<128x128xf32>
    %cst_16 = arith.constant 2.000000e+00 : f32
    %21 = vector.broadcast %cst_16 : f32 to vector<128x128xf32>
    %22 = arith.mulf %21, %20 : vector<128x128xf32>
    %23 = arith.subf %22, %16 : vector<128x128xf32>
    %24 = arith.truncf %23 : vector<128x128xf32> to vector<128x128xbf16>
    %25 = tpu.concatenate %17, %19, %24 in 1 : vector<128x128xbf16>, vector<128x128xbf16>, vector<128x128xbf16> -> vector<128x384xbf16>
    %c0_17 = arith.constant 0 : index
    %c0_18 = arith.constant 0 : index
    %26 = vector.load %arg6[%c0_17, %c0_18] : memref<384x128xbf16, #tpu.memory_space<vmem>>, vector<384x128xbf16>
    %cst_19 = arith.constant dense<0.000000e+00> : vector<128x128xf32>
    %27 = tpu.matmul %25, %26, %cst_19 {dimension_numbers = #tpu.dot_dimension_numbers<[1], [0], [0], [1], [0, 0, 1, 1], [], []>} : vector<128x384xbf16>, vector<384x128xbf16>, vector<128x128xf32> -> vector<128x128xf32>
    %c0_20 = arith.constant 0 : index
    %c0_21 = arith.constant 0 : index
    %28 = vector.load %arg7[%c0_20, %c0_21] : memref<1x128xf32, #tpu.memory_space<vmem>>, vector<1x128xf32>
    %29 = vector.broadcast %28 : vector<1x128xf32> to vector<128x128xf32>
    %30 = arith.addf %27, %29 : vector<128x128xf32>
    %cst_22 = arith.constant 0.000000e+00 : f32
    %31 = vector.broadcast %cst_22 : f32 to vector<128x128xf32>
    %32 = arith.maximumf %30, %31 : vector<128x128xf32>
    %33 = arith.truncf %32 : vector<128x128xf32> to vector<128x128xbf16>
    %cst_23 = arith.constant dense<0.000000e+00> : vector<128x128xf32>
    %34 = tpu.matmul %0, %33, %cst_23 {dimension_numbers = #tpu.dot_dimension_numbers<[1], [0], [0], [1], [0, 0, 1, 1], [], []>} : vector<128x128xbf16>, vector<128x128xbf16>, vector<128x128xf32> -> vector<128x128xf32>
    %35 = arith.truncf %34 : vector<128x128xf32> to vector<128x128xbf16>
    %cst_24 = arith.constant dense<0.000000e+00> : vector<128x128xf32>
    %36 = tpu.matmul %0, %35, %cst_24 {dimension_numbers = #tpu.dot_dimension_numbers<[1], [0], [0], [1], [0, 0, 1, 1], [], []>} : vector<128x128xbf16>, vector<128x128xbf16>, vector<128x128xf32> -> vector<128x128xf32>
    %cst_25 = arith.constant 2.000000e+00 : f32
    %37 = vector.broadcast %cst_25 : f32 to vector<128x128xf32>
    %38 = arith.mulf %37, %36 : vector<128x128xf32>
    %39 = arith.subf %38, %32 : vector<128x128xf32>
    %40 = arith.truncf %39 : vector<128x128xf32> to vector<128x128xbf16>
    %41 = tpu.concatenate %33, %35, %40 in 1 : vector<128x128xbf16>, vector<128x128xbf16>, vector<128x128xbf16> -> vector<128x384xbf16>
    %c0_26 = arith.constant 0 : index
    %c0_27 = arith.constant 0 : index
    %42 = vector.load %arg8[%c0_26, %c0_27] : memref<384x128xbf16, #tpu.memory_space<vmem>>, vector<384x128xbf16>
    %cst_28 = arith.constant dense<0.000000e+00> : vector<128x128xf32>
    %43 = tpu.matmul %41, %42, %cst_28 {dimension_numbers = #tpu.dot_dimension_numbers<[1], [0], [0], [1], [0, 0, 1, 1], [], []>} : vector<128x384xbf16>, vector<384x128xbf16>, vector<128x128xf32> -> vector<128x128xf32>
    %c0_29 = arith.constant 0 : index
    %c0_30 = arith.constant 0 : index
    %44 = vector.load %arg9[%c0_29, %c0_30] : memref<1x128xf32, #tpu.memory_space<vmem>>, vector<1x128xf32>
    %45 = vector.broadcast %44 : vector<1x128xf32> to vector<128x128xf32>
    %46 = arith.addf %43, %45 : vector<128x128xf32>
    %cst_31 = arith.constant 0.000000e+00 : f32
    %47 = vector.broadcast %cst_31 : f32 to vector<128x128xf32>
    %48 = arith.maximumf %46, %47 : vector<128x128xf32>
    %49 = arith.truncf %48 : vector<128x128xf32> to vector<128x128xbf16>
    %c0_32 = arith.constant 0 : index
    %c0_33 = arith.constant 0 : index
    %50 = vector.load %arg10[%c0_32, %c0_33] : memref<128x128xbf16, #tpu.memory_space<vmem>>, vector<128x128xbf16>
    %cst_34 = arith.constant dense<0.000000e+00> : vector<128x128xf32>
    %51 = tpu.matmul %49, %50, %cst_34 {dimension_numbers = #tpu.dot_dimension_numbers<[1], [0], [0], [1], [0, 0, 1, 1], [], []>} : vector<128x128xbf16>, vector<128x128xbf16>, vector<128x128xf32> -> vector<128x128xf32>
    %c0_35 = arith.constant 0 : index
    %c0_36 = arith.constant 0 : index
    %52 = vector.load %arg11[%c0_35, %c0_36] : memref<1x128xf32, #tpu.memory_space<vmem>>, vector<1x128xf32>
    %53 = vector.broadcast %52 : vector<1x128xf32> to vector<128x128xf32>
    %54 = arith.addf %51, %53 : vector<128x128xf32>
    %cst_37 = arith.constant 0.000000e+00 : f32
    %55 = vector.broadcast %cst_37 : f32 to vector<128x128xf32>
    %56 = arith.maximumf %54, %55 : vector<128x128xf32>
    %57 = arith.truncf %56 : vector<128x128xf32> to vector<128x128xbf16>
    %c0_38 = arith.constant 0 : index
    %c0_39 = arith.constant 0 : index
    %58 = vector.load %arg12[%c0_38, %c0_39] : memref<128x128xbf16, #tpu.memory_space<vmem>>, vector<128x128xbf16>
    %cst_40 = arith.constant dense<0.000000e+00> : vector<128x128xf32>
    %59 = tpu.matmul %57, %58, %cst_40 {dimension_numbers = #tpu.dot_dimension_numbers<[1], [0], [0], [1], [0, 0, 1, 1], [], []>} : vector<128x128xbf16>, vector<128x128xbf16>, vector<128x128xf32> -> vector<128x128xf32>
    %c0_41 = arith.constant 0 : index
    %c0_42 = arith.constant 0 : index
    %60 = vector.load %arg13[%c0_41, %c0_42] : memref<1x128xf32, #tpu.memory_space<vmem>>, vector<1x128xf32>
    %61 = vector.broadcast %60 : vector<1x128xf32> to vector<128x128xf32>
    %62 = arith.addf %59, %61 : vector<128x128xf32>
    %c0_43 = arith.constant 0 : index
    %c0_44 = arith.constant 0 : index
    %63 = vector.load %arg14[%c0_43, %c0_44] : memref<128x128xf32, #tpu.memory_space<vmem>>, vector<128x128xf32>
    tpu.vector_store %arg14[%c0_43, %c0_44], %62 {strides = array<i32>} : memref<128x128xf32, #tpu.memory_space<vmem>>, vector<128x128xf32>,
    return
  }
}

</mosaic_0001>

<llo_original>
// kernel: tpu_custom_call.1
$region0: #{tpu_custom_call.1}
  #allocation0 [shape = 'u32[]', space=smem, size = 0x4, offset = 0x4, fixed_abs, tag = 'smem constant byte address 0x4 - core index']
  #allocation1 [shape = 'u32[144,128]{1,0:T(1,128)}', space=vmem, size = 0x12000, scoped, tag = 'internal scratch']
  %s0 = inlined_call_operand.hbm [shape: bf16[128,128], index: 0, kind: input, shape index: {}]
  %s1 = inlined_call_operand.hbm [shape: bf16[128,128], index: 1, kind: input, shape index: {}]
  %s2 = inlined_call_operand.hbm [shape: bf16[128,128], index: 2, kind: input, shape index: {}]
  %s3 = inlined_call_operand.vmem [shape: f32[1,128], index: 3, kind: input, shape index: {}]
  %s4 = inlined_call_operand.hbm [shape: bf16[128,128], index: 4, kind: input, shape index: {}]
  %s5 = inlined_call_operand.vmem [shape: f32[1,128], index: 5, kind: input, shape index: {}]
  %s6 = inlined_call_operand.hbm [shape: bf16[384,128], index: 6, kind: input, shape index: {}]
  %s7 = inlined_call_operand.vmem [shape: f32[1,128], index: 7, kind: input, shape index: {}]
  %s8 = inlined_call_operand.hbm [shape: bf16[384,128], index: 8, kind: input, shape index: {}]
  %s9 = inlined_call_operand.vmem [shape: f32[1,128], index: 9, kind: input, shape index: {}]
  %s10 = inlined_call_operand.hbm [shape: bf16[128,128], index: 10, kind: input, shape index: {}]
  %s11 = inlined_call_operand.vmem [shape: f32[1,128], index: 11, kind: input, shape index: {}]
  %s12 = inlined_call_operand.hbm [shape: bf16[128,128], index: 12, kind: input, shape index: {}]
  %s13 = inlined_call_operand.vmem [shape: f32[1,128], index: 13, kind: input, shape index: {}]
  %s14 = inlined_call_operand.hbm [shape: f32[128,128], index: 14, kind: output, shape index: {}]
  %s15 = sld [smem:[#allocation0]]
  $region98: #{tpu_custom_call.1} parent=0
    _
  %s17 = ssub.s32 1, %s15
  %s18 = scalar_select 0, %s17, %s15
  $region1: #{tpu_custom_call.1} parent=0
    #allocation2 [shape = 'u8[32768]{0}', space=vmem, size = 0x8000, scoped, tag = 'input window, operand 0, single buffered']
    #allocation3 [shape = 's32[1]{0}', space=sflag, size = 0x4, scoped, tag = 'scoped memory for tpu_custom_call.1']
    #allocation4 [shape = 's32[1]{0}', space=sflag, size = 0x4, scoped, tag = 'scoped memory for tpu_custom_call.1']
    #allocation5 [shape = 'u8[32768]{0}', space=vmem, size = 0x8000, scoped, tag = 'input window, operand 1, single buffered']
    #allocation6 [shape = 's32[1]{0}', space=sflag, size = 0x4, scoped, tag = 'scoped memory for tpu_custom_call.1']
    #allocation7 [shape = 'u8[32768]{0}', space=vmem, size = 0x8000, scoped, tag = 'input window, operand 2, single buffered']
    #allocation8 [shape = 'u8[32768]{0}', space=vmem, size = 0x8000, scoped, tag = 'input window, operand 4, single buffered']
    #allocation9 [shape = 's32[1]{0}', space=sflag, size = 0x4, scoped, tag = 'scoped memory for tpu_custom_call.1']
    #allocation10 [shape = 'u8[98304]{0}', space=vmem, size = 0x18000, scoped, tag = 'input window, operand 6, single buffered']
    #allocation11 [shape = 'u8[98304]{0}', space=vmem, size = 0x18000, scoped, tag = 'input window, operand 8, single buffered']
    #allocation12 [shape = 's32[1]{0}', space=sflag, size = 0x4, scoped, tag = 'scoped memory for tpu_custom_call.1']
    #allocation13 [shape = 'u8[32768]{0}', space=vmem, size = 0x8000, scoped, tag = 'input window, operand 10, single buffered']
    #allocation14 [shape = 'u8[32768]{0}', space=vmem, size = 0x8000, scoped, tag = 'input window, operand 12, single buffered']
    #allocation15 [shape = 's32[1]{0}', space=sflag, size = 0x4, scoped, tag = 'scoped memory for tpu_custom_call.1']
    #allocation16 [shape = 'u8[65536]{0}', space=vmem, size = 0x10000, scoped, tag = 'output window, operand 0, single buffered']
    %19 = vsyncpa [#allocation3], 0
    %20 = vsyncpa [#allocation6], 0
    %21 = vsyncpa [#allocation9], 0
    %22 = vsyncpa [#allocation12], 0
    %23 = vsyncpa [#allocation15], 0
    %24 = vsyncpa [#allocation4], 0
    // Predicated region
    $region2: #{tpu_custom_call.1} parent=1 // pred_check
      _
    $region3: #{tpu_custom_call.1} parent=1 // pred_check_branch
      %26 = sbr.rel (0) target = $region5
    $region4: #{tpu_custom_call.1} parent=1 // pred_region
      %s28 = ssub.s32 1024, 1024
      %29 = vsyncadd [#allocation3], %s28
      %s30 = sshll.u32 [#allocation2], 4
      %s31 = int_to_ptr.vmem [resolvable:$true] %s30
      %36 = dma.hbm_to_vmem [thread:$0]  %s0, 1024, %s31, [#allocation3], 64, 64, 4
    $region5: #{tpu_custom_call.1} parent=1 // pred_fallthru
      _
    // Predicated region
    $region6: #{tpu_custom_call.1} parent=1 // pred_check
      _
    $region7: #{tpu_custom_call.1} parent=1 // pred_check_branch
      %38 = sbr.rel (0) target = $region9
    $region8: #{tpu_custom_call.1} parent=1 // pred_region
      %s40 = ssub.s32 1024, 1024
      %41 = vsyncadd [#allocation6], %s40
      %s42 = sshll.u32 [#allocation5], 4
      %s43 = int_to_ptr.vmem [resolvable:$true] %s42
      %48 = dma.hbm_to_vmem [thread:$0]  %s1, 1024, %s43, [#allocation6], 64, 64, 4
    $region9: #{tpu_custom_call.1} parent=1 // pred_fallthru
      _
    // Predicated region
    $region10: #{tpu_custom_call.1} parent=1 // pred_check
      _
    $region11: #{tpu_custom_call.1} parent=1 // pred_check_branch
      %50 = sbr.rel (0) target = $region13
    $region12: #{tpu_custom_call.1} parent=1 // pred_region
      %s52 = ssub.s32 1024, 1024
      %53 = vsyncadd [#allocation6], %s52
      %s54 = sshll.u32 [#allocation7], 4
      %s55 = int_to_ptr.vmem [resolvable:$true] %s54
      %60 = dma.hbm_to_vmem [thread:$0]  %s2, 1024, %s55, [#allocation6], 64, 64, 4
    $region13: #{tpu_custom_call.1} parent=1 // pred_fallthru
      _
    // Predicated region
    $region14: #{tpu_custom_call.1} parent=1 // pred_check
      _
    $region15: #{tpu_custom_call.1} parent=1 // pred_check_branch
      %62 = sbr.rel (0) target = $region17
    $region16: #{tpu_custom_call.1} parent=1 // pred_region
      _
    $region17: #{tpu_custom_call.1} parent=1 // pred_fallthru
      _
    // Predicated region
    $region18: #{tpu_custom_call.1} parent=1 // pred_check
      _
    $region19: #{tpu_custom_call.1} parent=1 // pred_check_branch
      %64 = sbr.rel (0) target = $region21
    $region20: #{tpu_custom_call.1} parent=1 // pred_region
      %s66 = ssub.s32 1024, 1024
      %67 = vsyncadd [#allocation9], %s66
      %s68 = sshll.u32 [#allocation8], 4
      %s69 = int_to_ptr.vmem [resolvable:$true] %s68
      %74 = dma.hbm_to_vmem [thread:$0]  %s4, 1024, %s69, [#allocation9], 64, 64, 4
    $region21: #{tpu_custom_call.1} parent=1 // pred_fallthru
      _
    // Predicated region
    $region22: #{tpu_custom_call.1} parent=1 // pred_check
      _
    $region23: #{tpu_custom_call.1} parent=1 // pred_check_branch
      %76 = sbr.rel (0) target = $region25
    $region24: #{tpu_custom_call.1} parent=1 // pred_region
      _
    $region25: #{tpu_custom_call.1} parent=1 // pred_fallthru
      _
    // Predicated region
    $region26: #{tpu_custom_call.1} parent=1 // pred_check
      _
    $region27: #{tpu_custom_call.1} parent=1 // pred_check_branch
      %78 = sbr.rel (0) target = $region29
    $region28: #{tpu_custom_call.1} parent=1 // pred_region
      %s80 = ssub.s32 3072, 3072
      %81 = vsyncadd [#allocation9], %s80
      %s82 = sshll.u32 [#allocation10], 4
      %s83 = int_to_ptr.vmem [resolvable:$true] %s82
      %88 = dma.hbm_to_vmem [thread:$0]  %s6, 3072, %s83, [#allocation9], 64, 64, 4
    $region29: #{tpu_custom_call.1} parent=1 // pred_fallthru
      _
    // Predicated region
    $region30: #{tpu_custom_call.1} parent=1 // pred_check
      _
    $region31: #{tpu_custom_call.1} parent=1 // pred_check_branch
      %90 = sbr.rel (0) target = $region33
    $region32: #{tpu_custom_call.1} parent=1 // pred_region
      _
    $region33: #{tpu_custom_call.1} parent=1 // pred_fallthru
      _
    // Predicated region
    $region34: #{tpu_custom_call.1} parent=1 // pred_check
      _
    $region35: #{tpu_custom_call.1} parent=1 // pred_check_branch
      %92 = sbr.rel (0) target = $region37
    $region36: #{tpu_custom_call.1} parent=1 // pred_region
      %s94 = ssub.s32 3072, 3072
      %95 = vsyncadd [#allocation12], %s94
      %s96 = sshll.u32 [#allocation11], 4
      %s97 = int_to_ptr.vmem [resolvable:$true] %s96
      %102 = dma.hbm_to_vmem [thread:$0]  %s8, 3072, %s97, [#allocation12], 64, 64, 4
    $region37: #{tpu_custom_call.1} parent=1 // pred_fallthru
      _
    // Predicated region
    $region38: #{tpu_custom_call.1} parent=1 // pred_check
      _
    $region39: #{tpu_custom_call.1} parent=1 // pred_check_branch
      %104 = sbr.rel (0) target = $region41
    $region40: #{tpu_custom_call.1} parent=1 // pred_region
      _
    $region41: #{tpu_custom_call.1} parent=1 // pred_fallthru
      _
    // Predicated region
    $region42: #{tpu_custom_call.1} parent=1 // pred_check
      _
    $region43: #{tpu_custom_call.1} parent=1 // pred_check_branch
      %106 = sbr.rel (0) target = $region45
    $region44: #{tpu_custom_call.1} parent=1 // pred_region
      %s108 = ssub.s32 1024, 1024
      %109 = vsyncadd [#allocation12], %s108
      %s110 = sshll.u32 [#allocation13], 4
      %s111 = int_to_ptr.vmem [resolvable:$true] %s110
      %116 = dma.hbm_to_vmem [thread:$0]  %s10, 1024, %s111, [#allocation12], 64, 64, 4
    $region45: #{tpu_custom_call.1} parent=1 // pred_fallthru
      _
    // Predicated region
    $region46: #{tpu_custom_call.1} parent=1 // pred_check
      _
    $region47: #{tpu_custom_call.1} parent=1 // pred_check_branch
      %118 = sbr.rel (0) target = $region49
    $region48: #{tpu_custom_call.1} parent=1 // pred_region
      _
    $region49: #{tpu_custom_call.1} parent=1 // pred_fallthru
      _
    // Predicated region
    $region50: #{tpu_custom_call.1} parent=1 // pred_check
      _
    $region51: #{tpu_custom_call.1} parent=1 // pred_check_branch
      %120 = sbr.rel (0) target = $region53
    $region52: #{tpu_custom_call.1} parent=1 // pred_region
      %s122 = ssub.s32 1024, 1024
      %123 = vsyncadd [#allocation15], %s122
      %s124 = sshll.u32 [#allocation14], 4
      %s125 = int_to_ptr.vmem [resolvable:$true] %s124
      %130 = dma.hbm_to_vmem [thread:$0]  %s12, 1024, %s125, [#allocation15], 64, 64, 4
    $region53: #{tpu_custom_call.1} parent=1 // pred_fallthru
      _
    // Predicated region
    $region54: #{tpu_custom_call.1} parent=1 // pred_check
      _
    $region55: #{tpu_custom_call.1} parent=1 // pred_check_branch
      %132 = sbr.rel (0) target = $region57
    $region56: #{tpu_custom_call.1} parent=1 // pred_region
      _
    $region57: #{tpu_custom_call.1} parent=1 // pred_fallthru
      _
    // Predicated region
    $region58: #{tpu_custom_call.1} parent=1 // pred_check
      _
    $region59: #{tpu_custom_call.1} parent=1 // pred_check_branch
      %134 = sbr.rel (0) target = $region61
    $region60: #{tpu_custom_call.1} parent=1 // pred_region
      %135 = dma.done [#allocation3], 1024
    $region61: #{tpu_custom_call.1} parent=1 // pred_fallthru
      _
    // Predicated region
    $region62: #{tpu_custom_call.1} parent=1 // pred_check
      _
    $region63: #{tpu_custom_call.1} parent=1 // pred_check_branch
      %137 = sbr.rel (0) target = $region65
    $region64: #{tpu_custom_call.1} parent=1 // pred_region
      %138 = dma.done [#allocation6], 1024
    $region65: #{tpu_custom_call.1} parent=1 // pred_fallthru
      _
    // Predicated region
    $region66: #{tpu_custom_call.1} parent=1 // pred_check
      _
    $region67: #{tpu_custom_call.1} parent=1 // pred_check_branch
      %140 = sbr.rel (0) target = $region69
    $region68: #{tpu_custom_call.1} parent=1 // pred_region
      %141 = dma.done [#allocation6], 1024
    $region69: #{tpu_custom_call.1} parent=1 // pred_fallthru
      _
    // Predicated region
    $region70: #{tpu_custom_call.1} parent=1 // pred_check
      _
    $region71: #{tpu_custom_call.1} parent=1 // pred_check_branch
      %143 = sbr.rel (0) target = $region73
    $region72: #{tpu_custom_call.1} parent=1 // pred_region
      %144 = dma.done [#allocation9], 1024
    $region73: #{tpu_custom_call.1} parent=1 // pred_fallthru
      _
    // Predicated region
    $region74: #{tpu_custom_call.1} parent=1 // pred_check
      _
    $region75: #{tpu_custom_call.1} parent=1 // pred_check_branch
      %146 = sbr.rel (0) target = $region77
    $region76: #{tpu_custom_call.1} parent=1 // pred_region
      %147 = dma.done [#allocation9], 3072
    $region77: #{tpu_custom_call.1} parent=1 // pred_fallthru
      _
    // Predicated region
    $region78: #{tpu_custom_call.1} parent=1 // pred_check
      _
    $region79: #{tpu_custom_call.1} parent=1 // pred_check_branch
      %149 = sbr.rel (0) target = $region81
    $region80: #{tpu_custom_call.1} parent=1 // pred_region
      %150 = dma.done [#allocation12], 3072
    $region81: #{tpu_custom_call.1} parent=1 // pred_fallthru
      _
    // Predicated region
    $region82: #{tpu_custom_call.1} parent=1 // pred_check
      _
    $region83: #{tpu_custom_call.1} parent=1 // pred_check_branch
      %152 = sbr.rel (0) target = $region85
    $region84: #{tpu_custom_call.1} parent=1 // pred_region
      %153 = dma.done [#allocation12], 1024
    $region85: #{tpu_custom_call.1} parent=1 // pred_fallthru
      _
    // Predicated region
    $region86: #{tpu_custom_call.1} parent=1 // pred_check
      _
    $region87: #{tpu_custom_call.1} parent=1 // pred_check_branch
      %155 = sbr.rel (0) target = $region89
    $region88: #{tpu_custom_call.1} parent=1 // pred_region
      %156 = dma.done [#allocation15], 1024
    $region89: #{tpu_custom_call.1} parent=1 // pred_fallthru
      _
    %v158 = vld [vmem:[#allocation2] sm:$0xf]
    %v159 = vld [vmem:[#allocation2 + $0x4] sm:$0xf]
    %v160 = vld [vmem:[#allocation2 + $0x8] sm:$0xf]
    %v161 = vld [vmem:[#allocation2 + $0xc] sm:$0xf]
    %v162 = vld [vmem:[#allocation2 + $0x10] sm:$0xf]
    %v163 = vld [vmem:[#allocation2 + $0x14] sm:$0xf]
    %v164 = vld [vmem:[#allocation2 + $0x18] sm:$0xf]
    %v165 = vld [vmem:[#allocation2 + $0x1c] sm:$0xf]
    %v166 = vld [vmem:[#allocation2 + $0x20] sm:$0xf]
    %v167 = vld [vmem:[#allocation2 + $0x24] sm:$0xf]
    %v168 = vld [vmem:[#allocation2 + $0x28] sm:$0xf]
    %v169 = vld [vmem:[#allocation2 + $0x2c] sm:$0xf]
    %v170 = vld [vmem:[#allocation2 + $0x30] sm:$0xf]
    %v171 = vld [vmem:[#allocation2 + $0x34] sm:$0xf]
    %v172 = vld [vmem:[#allocation2 + $0x38] sm:$0xf]
    %v173 = vld [vmem:[#allocation2 + $0x3c] sm:$0xf]
    %v174 = vld [vmem:[#allocation5] sm:$0xf]
    %v175 = vld [vmem:[#allocation5 + $0x4] sm:$0xf]
    %v176 = vld [vmem:[#allocation5 + $0x8] sm:$0xf]
    %v177 = vld [vmem:[#allocation5 + $0xc] sm:$0xf]
    %v178 = vld [vmem:[#allocation5 + $0x10] sm:$0xf]
    %v179 = vld [vmem:[#allocation5 + $0x14] sm:$0xf]
    %v180 = vld [vmem:[#allocation5 + $0x18] sm:$0xf]
    %v181 = vld [vmem:[#allocation5 + $0x1c] sm:$0xf]
    %v182 = vld [vmem:[#allocation5 + $0x20] sm:$0xf]
    %v183 = vld [vmem:[#allocation5 + $0x24] sm:$0xf]
    %v184 = vld [vmem:[#allocation5 + $0x28] sm:$0xf]
    %v185 = vld [vmem:[#allocation5 + $0x2c] sm:$0xf]
    %v186 = vld [vmem:[#allocation5 + $0x30] sm:$0xf]
    %v187 = vld [vmem:[#allocation5 + $0x34] sm:$0xf]
    %v188 = vld [vmem:[#allocation5 + $0x38] sm:$0xf]
    %v189 = vld [vmem:[#allocation5 + $0x3c] sm:$0xf]
    %v190 = vld [vmem:[#allocation7] sm:$0xf]
    %v191 = vld [vmem:[#allocation7 + $0x4] sm:$0xf]
    %v192 = vld [vmem:[#allocation7 + $0x8] sm:$0xf]
    %v193 = vld [vmem:[#allocation7 + $0xc] sm:$0xf]
    %v194 = vld [vmem:[#allocation7 + $0x10] sm:$0xf]
    %v195 = vld [vmem:[#allocation7 + $0x14] sm:$0xf]
    %v196 = vld [vmem:[#allocation7 + $0x18] sm:$0xf]
    %v197 = vld [vmem:[#allocation7 + $0x1c] sm:$0xf]
    %v198 = vld [vmem:[#allocation7 + $0x20] sm:$0xf]
    %v199 = vld [vmem:[#allocation7 + $0x24] sm:$0xf]
    %v200 = vld [vmem:[#allocation7 + $0x28] sm:$0xf]
    %v201 = vld [vmem:[#allocation7 + $0x2c] sm:$0xf]
    %v202 = vld [vmem:[#allocation7 + $0x30] sm:$0xf]
    %v203 = vld [vmem:[#allocation7 + $0x34] sm:$0xf]
    %v204 = vld [vmem:[#allocation7 + $0x38] sm:$0xf]
    %v205 = vld [vmem:[#allocation7 + $0x3c] sm:$0xf]
    %v206 = vld [vmem:[%s3] sm:$0x1]
    %v208 = vlaneseq
    %v209 = vshrl.u32 %v208, 7
    %v210 = vsub.s32 0, %v209
    %v211 = vrot.slane %v206, %v210
    %v229 = vunpack.c.l.b16 %v174
    %v230 = vunpack.c.l.b16 %v175
    %v231 = vunpack.c.l.b16 %v176
    %v232 = vunpack.c.l.b16 %v177
    %v233 = vunpack.c.l.b16 %v178
    %v234 = vunpack.c.l.b16 %v179
    %v235 = vunpack.c.l.b16 %v180
    %v236 = vunpack.c.l.b16 %v181
    %v237 = vunpack.c.l.b16 %v182
    %v238 = vunpack.c.l.b16 %v183
    %v239 = vunpack.c.l.b16 %v184
    %v240 = vunpack.c.l.b16 %v185
    %v241 = vunpack.c.l.b16 %v186
    %v242 = vunpack.c.l.b16 %v187
    %v243 = vunpack.c.l.b16 %v188
    %v244 = vunpack.c.l.b16 %v189
    %v245 = vpack.c.b16 %v230, %v229
    %v246 = vpack.c.b16 %v232, %v231
    %v247 = vpack.c.b16 %v234, %v233
    %v248 = vpack.c.b16 %v236, %v235
    %v249 = vpack.c.b16 %v238, %v237
    %v250 = vpack.c.b16 %v240, %v239
    %v251 = vpack.c.b16 %v242, %v241
    %v252 = vpack.c.b16 %v244, %v243
    %v277 = vunpack.c.l.b16 %v190
    %v278 = vunpack.c.l.b16 %v191
    %v279 = vunpack.c.l.b16 %v192
    %v280 = vunpack.c.l.b16 %v193
    %v281 = vunpack.c.l.b16 %v194
    %v282 = vunpack.c.l.b16 %v195
    %v283 = vunpack.c.l.b16 %v196
    %v284 = vunpack.c.l.b16 %v197
    %v285 = vunpack.c.l.b16 %v198
    %v286 = vunpack.c.l.b16 %v199
    %v287 = vunpack.c.l.b16 %v200
    %v288 = vunpack.c.l.b16 %v201
    %v289 = vunpack.c.l.b16 %v202
    %v290 = vunpack.c.l.b16 %v203
    %v291 = vunpack.c.l.b16 %v204
    %v292 = vunpack.c.l.b16 %v205
    %v293 = vpack.c.b16 %v278, %v277
    %v294 = vpack.c.b16 %v280, %v279
    %v295 = vpack.c.b16 %v282, %v281
    %v296 = vpack.c.b16 %v284, %v283
    %v297 = vpack.c.b16 %v286, %v285
    %v298 = vpack.c.b16 %v288, %v287
    %v299 = vpack.c.b16 %v290, %v289
    %v300 = vpack.c.b16 %v292, %v291
    %309 = vmatprep.subr.bf16.mxu0 0
    %310 = vmatpush1.bf16.msra.mxu0 %v293
    %311 = vmatprep.subr.bf16.mxu0 0
    %312 = vmatpush1.bf16.msra.mxu0 %v294
    %313 = vmatprep.subr.bf16.mxu0 0
    %314 = vmatpush1.bf16.msra.mxu0 %v295
    %315 = vmatprep.subr.bf16.mxu0 0
    %316 = vmatpush1.bf16.msra.mxu0 %v296
    %317 = vmatprep.subr.bf16.mxu0 0
    %318 = vmatpush1.bf16.msra.mxu0 %v297
    %319 = vmatprep.subr.bf16.mxu0 0
    %320 = vmatpush1.bf16.msra.mxu0 %v298
    %321 = vmatprep.subr.bf16.mxu0 0
    %322 = vmatpush1.bf16.msra.mxu0 %v299
    %323 = vmatprep.subr.bf16.mxu0 0
    %324 = vmatpush1.bf16.msra.mxu0 %v300
    %325 = vmatprep.subr.bf16.mxu0 0
    %326 = vmatpush1.bf16.msra.mxu0 0
    %327 = vmatprep.subr.bf16.mxu0 0
    %328 = vmatpush1.bf16.msra.mxu0 0
    %329 = vmatprep.subr.bf16.mxu0 0
    %330 = vmatpush1.bf16.msra.mxu0 0
    %331 = vmatprep.subr.bf16.mxu0 0
    %332 = vmatpush1.bf16.msra.mxu0 0
    %333 = vmatprep.subr.bf16.mxu0 0
    %334 = vmatpush1.bf16.msra.mxu0 0
    %335 = vmatprep.subr.bf16.mxu0 0
    %336 = vmatpush1.bf16.msra.mxu0 0
    %337 = vmatprep.subr.bf16.mxu0 0
    %338 = vmatpush1.bf16.msra.mxu0 0
    %339 = vmatprep.subr.bf16.mxu0 0
    %340 = vmatpush1.bf16.msra.mxu0 0
    %341 = vmatprep.mubr.bf16.mxu0 0
    %342 = vmatmul.mubr.bf16.gmra.mrb[0].mxu0 %v245
    %v343 = vpop.f32.mrb[0].mxu0
    %v344 = vadd.f32 %v211, %v343
    %v345 = vpop.f32.mrb[0].mxu0
    %v346 = vpop.f32.mrb[0].mxu0
    %v347 = vadd.f32 %v211, %v346
    %v348 = vpop.f32.mrb[0].mxu0
    %349 = vmatprep.mubr.bf16.mxu0 0
    %350 = vmatmul.mubr.bf16.gmra.mrb[0].mxu0 %v246
    %v351 = vpop.f32.mrb[0].mxu0
    %v352 = vadd.f32 %v211, %v351
    %v353 = vpop.f32.mrb[0].mxu0
    %v354 = vpop.f32.mrb[0].mxu0
    %v355 = vadd.f32 %v211, %v354
    %v356 = vpop.f32.mrb[0].mxu0
    %357 = vmatprep.mubr.bf16.mxu0 0
    %358 = vmatmul.mubr.bf16.gmra.mrb[0].mxu0 %v247
    %v359 = vpop.f32.mrb[0].mxu0
    %v360 = vadd.f32 %v211, %v359
    %v361 = vpop.f32.mrb[0].mxu0
    %v362 = vpop.f32.mrb[0].mxu0
    %v363 = vadd.f32 %v211, %v362
    %v364 = vpop.f32.mrb[0].mxu0
    %365 = vmatprep.mubr.bf16.mxu0 0
    %366 = vmatmul.mubr.bf16.gmra.mrb[0].mxu0 %v248
    %v367 = vpop.f32.mrb[0].mxu0
    %v368 = vadd.f32 %v211, %v367
    %v369 = vpop.f32.mrb[0].mxu0
    %v370 = vpop.f32.mrb[0].mxu0
    %v371 = vadd.f32 %v211, %v370
    %v372 = vpop.f32.mrb[0].mxu0
    %373 = vmatprep.mubr.bf16.mxu0 0
    %374 = vmatmul.mubr.bf16.gmra.mrb[0].mxu0 %v249
    %v375 = vpop.f32.mrb[0].mxu0
    %v376 = vadd.f32 %v211, %v375
    %v377 = vpop.f32.mrb[0].mxu0
    %v378 = vpop.f32.mrb[0].mxu0
    %v379 = vadd.f32 %v211, %v378
    %v380 = vpop.f32.mrb[0].mxu0
    %381 = vmatprep.mubr.bf16.mxu0 0
    %382 = vmatmul.mubr.bf16.gmra.mrb[0].mxu0 %v250
    %v383 = vpop.f32.mrb[0].mxu0
    %v384 = vadd.f32 %v211, %v383
    %v385 = vpop.f32.mrb[0].mxu0
    %v386 = vpop.f32.mrb[0].mxu0
    %v387 = vadd.f32 %v211, %v386
    %v388 = vpop.f32.mrb[0].mxu0
    %389 = vmatprep.mubr.bf16.mxu0 0
    %390 = vmatmul.mubr.bf16.gmra.mrb[0].mxu0 %v251
    %v391 = vpop.f32.mrb[0].mxu0
    %v392 = vadd.f32 %v211, %v391
    %v393 = vpop.f32.mrb[0].mxu0
    %v394 = vpop.f32.mrb[0].mxu0
    %v395 = vadd.f32 %v211, %v394
    %v396 = vpop.f32.mrb[0].mxu0
    %397 = vmatprep.mubr.bf16.mxu0 0
    %398 = vmatmul.mubr.bf16.gmra.mrb[0].mxu0 %v252
    %v399 = vpop.f32.mrb[0].mxu0
    %v400 = vadd.f32 %v211, %v399
    %v401 = vpop.f32.mrb[0].mxu0
    %v402 = vpop.f32.mrb[0].mxu0
    %v403 = vadd.f32 %v211, %v402
    %v404 = vpop.f32.mrb[0].mxu0
    %405 = vdwg.mxu0
    %v406 = vmax.f32 %v344, 0.0
    %v407 = vmax.f32 %v347, 0.0
    %v408 = vmax.f32 %v352, 0.0
    %v409 = vmax.f32 %v355, 0.0
    %v410 = vmax.f32 %v360, 0.0
    %v411 = vmax.f32 %v363, 0.0
    %v412 = vmax.f32 %v368, 0.0
    %v413 = vmax.f32 %v371, 0.0
    %v414 = vmax.f32 %v376, 0.0
    %v415 = vmax.f32 %v379, 0.0
    %v416 = vmax.f32 %v384, 0.0
    %v417 = vmax.f32 %v387, 0.0
    %v418 = vmax.f32 %v392, 0.0
    %v419 = vmax.f32 %v395, 0.0
    %v420 = vmax.f32 %v400, 0.0
    %v421 = vmax.f32 %v403, 0.0
    %v422 = vpack.c.bf16 %v407, %v406
    %v423 = vpack.c.bf16 %v409, %v408
    %v424 = vpack.c.bf16 %v411, %v410
    %v425 = vpack.c.bf16 %v413, %v412
    %v426 = vpack.c.bf16 %v415, %v414
    %v427 = vpack.c.bf16 %v417, %v416
    %v428 = vpack.c.bf16 %v419, %v418
    %v429 = vpack.c.bf16 %v421, %v420
    %v430 = vld [vmem:[#allocation8] sm:$0xf]
    %v431 = vld [vmem:[#allocation8 + $0x4] sm:$0xf]
    %v432 = vld [vmem:[#allocation8 + $0x8] sm:$0xf]
    %v433 = vld [vmem:[#allocation8 + $0xc] sm:$0xf]
    %v434 = vld [vmem:[#allocation8 + $0x10] sm:$0xf]
    %v435 = vld [vmem:[#allocation8 + $0x14] sm:$0xf]
    %v436 = vld [vmem:[#allocation8 + $0x18] sm:$0xf]
    %v437 = vld [vmem:[#allocation8 + $0x1c] sm:$0xf]
    %v438 = vld [vmem:[#allocation8 + $0x20] sm:$0xf]
    %v439 = vld [vmem:[#allocation8 + $0x24] sm:$0xf]
    %v440 = vld [vmem:[#allocation8 + $0x28] sm:$0xf]
    %v441 = vld [vmem:[#allocation8 + $0x2c] sm:$0xf]
    %v442 = vld [vmem:[#allocation8 + $0x30] sm:$0xf]
    %v443 = vld [vmem:[#allocation8 + $0x34] sm:$0xf]
    %v444 = vld [vmem:[#allocation8 + $0x38] sm:$0xf]
    %v445 = vld [vmem:[#allocation8 + $0x3c] sm:$0xf]
    %v446 = vld [vmem:[%s5] sm:$0x1]
    %v448 = vlaneseq
    %v449 = vshrl.u32 %v448, 7
    %v450 = vsub.s32 0, %v449
    %v451 = vrot.slane %v446, %v450
    %v469 = vunpack.c.l.b16 %v430
    %v470 = vunpack.c.l.b16 %v431
    %v471 = vunpack.c.l.b16 %v432
    %v472 = vunpack.c.l.b16 %v433
    %v473 = vunpack.c.l.b16 %v434
    %v474 = vunpack.c.l.b16 %v435
    %v475 = vunpack.c.l.b16 %v436
    %v476 = vunpack.c.l.b16 %v437
    %v477 = vunpack.c.l.b16 %v438
    %v478 = vunpack.c.l.b16 %v439
    %v479 = vunpack.c.l.b16 %v440
    %v480 = vunpack.c.l.b16 %v441
    %v481 = vunpack.c.l.b16 %v442
    %v482 = vunpack.c.l.b16 %v443
    %v483 = vunpack.c.l.b16 %v444
    %v484 = vunpack.c.l.b16 %v445
    %v485 = vpack.c.b16 %v470, %v469
    %v486 = vpack.c.b16 %v472, %v471
    %v487 = vpack.c.b16 %v474, %v473
    %v488 = vpack.c.b16 %v476, %v475
    %v489 = vpack.c.b16 %v478, %v477
    %v490 = vpack.c.b16 %v480, %v479
    %v491 = vpack.c.b16 %v482, %v481
    %v492 = vpack.c.b16 %v484, %v483
    %501 = vmatprep.subr.bf16.mxu0 0
    %502 = vmatpush1.bf16.msra.mxu0 %v485
    %503 = vmatprep.subr.bf16.mxu0 0
    %504 = vmatpush1.bf16.msra.mxu0 %v486
    %505 = vmatprep.subr.bf16.mxu0 0
    %506 = vmatpush1.bf16.msra.mxu0 %v487
    %507 = vmatprep.subr.bf16.mxu0 0
    %508 = vmatpush1.bf16.msra.mxu0 %v488
    %509 = vmatprep.subr.bf16.mxu0 0
    %510 = vmatpush1.bf16.msra.mxu0 %v489
    %511 = vmatprep.subr.bf16.mxu0 0
    %512 = vmatpush1.bf16.msra.mxu0 %v490
    %513 = vmatprep.subr.bf16.mxu0 0
    %514 = vmatpush1.bf16.msra.mxu0 %v491
    %515 = vmatprep.subr.bf16.mxu0 0
    %516 = vmatpush1.bf16.msra.mxu0 %v492
    %517 = vmatprep.subr.bf16.mxu0 0
    %518 = vmatpush1.bf16.msra.mxu0 0
    %519 = vmatprep.subr.bf16.mxu0 0
    %520 = vmatpush1.bf16.msra.mxu0 0
    %521 = vmatprep.subr.bf16.mxu0 0
    %522 = vmatpush1.bf16.msra.mxu0 0
    %523 = vmatprep.subr.bf16.mxu0 0
    %524 = vmatpush1.bf16.msra.mxu0 0
    %525 = vmatprep.subr.bf16.mxu0 0
    %526 = vmatpush1.bf16.msra.mxu0 0
    %527 = vmatprep.subr.bf16.mxu0 0
    %528 = vmatpush1.bf16.msra.mxu0 0
    %529 = vmatprep.subr.bf16.mxu0 0
    %530 = vmatpush1.bf16.msra.mxu0 0
    %531 = vmatprep.subr.bf16.mxu0 0
    %532 = vmatpush1.bf16.msra.mxu0 0
    %533 = vmatprep.mubr.bf16.mxu0 0
    %534 = vmatmul.mubr.bf16.gmra.mrb[0].mxu0 %v422
    %v535 = vpop.f32.mrb[0].mxu0
    %v536 = vadd.f32 %v451, %v535
    %v537 = vpop.f32.mrb[0].mxu0
    %v538 = vpop.f32.mrb[0].mxu0
    %v539 = vadd.f32 %v451, %v538
    %v540 = vpop.f32.mrb[0].mxu0
    %541 = vmatprep.mubr.bf16.mxu0 0
    %542 = vmatmul.mubr.bf16.gmra.mrb[0].mxu0 %v423
    %v543 = vpop.f32.mrb[0].mxu0
    %v544 = vadd.f32 %v451, %v543
    %v545 = vpop.f32.mrb[0].mxu0
    %v546 = vpop.f32.mrb[0].mxu0
    %v547 = vadd.f32 %v451, %v546
    %v548 = vpop.f32.mrb[0].mxu0
    %549 = vmatprep.mubr.bf16.mxu0 0
    %550 = vmatmul.mubr.bf16.gmra.mrb[0].mxu0 %v424
    %v551 = vpop.f32.mrb[0].mxu0
    %v552 = vadd.f32 %v451, %v551
    %v553 = vpop.f32.mrb[0].mxu0
    %v554 = vpop.f32.mrb[0].mxu0
    %v555 = vadd.f32 %v451, %v554
    %v556 = vpop.f32.mrb[0].mxu0
    %557 = vmatprep.mubr.bf16.mxu0 0
    %558 = vmatmul.mubr.bf16.gmra.mrb[0].mxu0 %v425
    %v559 = vpop.f32.mrb[0].mxu0
    %v560 = vadd.f32 %v451, %v559
    %v561 = vpop.f32.mrb[0].mxu0
    %v562 = vpop.f32.mrb[0].mxu0
    %v563 = vadd.f32 %v451, %v562
    %v564 = vpop.f32.mrb[0].mxu0
    %565 = vmatprep.mubr.bf16.mxu0 0
    %566 = vmatmul.mubr.bf16.gmra.mrb[0].mxu0 %v426
    %v567 = vpop.f32.mrb[0].mxu0
    %v568 = vadd.f32 %v451, %v567
    %v569 = vpop.f32.mrb[0].mxu0
    %v570 = vpop.f32.mrb[0].mxu0
    %v571 = vadd.f32 %v451, %v570
    %v572 = vpop.f32.mrb[0].mxu0
    %573 = vmatprep.mubr.bf16.mxu0 0
    %574 = vmatmul.mubr.bf16.gmra.mrb[0].mxu0 %v427
    %v575 = vpop.f32.mrb[0].mxu0
    %v576 = vadd.f32 %v451, %v575
    %v577 = vpop.f32.mrb[0].mxu0
    %v578 = vpop.f32.mrb[0].mxu0
    %v579 = vadd.f32 %v451, %v578
    %v580 = vpop.f32.mrb[0].mxu0
    %581 = vmatprep.mubr.bf16.mxu0 0
    %582 = vmatmul.mubr.bf16.gmra.mrb[0].mxu0 %v428
    %v583 = vpop.f32.mrb[0].mxu0
    %v584 = vadd.f32 %v451, %v583
    %v585 = vpop.f32.mrb[0].mxu0
    %v586 = vpop.f32.mrb[0].mxu0
    %v587 = vadd.f32 %v451, %v586
    %v588 = vpop.f32.mrb[0].mxu0
    %589 = vmatprep.mubr.bf16.mxu0 0
    %590 = vmatmul.mubr.bf16.gmra.mrb[0].mxu0 %v429
    %v591 = vpop.f32.mrb[0].mxu0
    %v592 = vadd.f32 %v451, %v591
    %v593 = vpop.f32.mrb[0].mxu0
    %v594 = vpop.f32.mrb[0].mxu0
    %v595 = vadd.f32 %v451, %v594
    %v596 = vpop.f32.mrb[0].mxu0
    %597 = vdwg.mxu0
    %v598 = vmax.f32 %v536, 0.0
    %v599 = vmax.f32 %v539, 0.0
    %v600 = vmax.f32 %v544, 0.0
    %v601 = vmax.f32 %v547, 0.0
    %v602 = vmax.f32 %v552, 0.0
    %v603 = vmax.f32 %v555, 0.0
    %v604 = vmax.f32 %v560, 0.0
    %v605 = vmax.f32 %v563, 0.0
    %v606 = vmax.f32 %v568, 0.0
    %v607 = vmax.f32 %v571, 0.0
    %v608 = vmax.f32 %v576, 0.0
    %v609 = vmax.f32 %v579, 0.0
    %v610 = vmax.f32 %v584, 0.0
    %v611 = vmax.f32 %v587, 0.0
    %v612 = vmax.f32 %v592, 0.0
    %v613 = vmax.f32 %v595, 0.0
    %v614 = vpack.c.bf16 %v599, %v598
    %v615 = vpack.c.bf16 %v601, %v600
    %v616 = vpack.c.bf16 %v603, %v602
    %v617 = vpack.c.bf16 %v605, %v604
    %v618 = vpack.c.bf16 %v607, %v606
    %v619 = vpack.c.bf16 %v609, %v608
    %v620 = vpack.c.bf16 %v611, %v610
    %v621 = vpack.c.bf16 %v613, %v612
    %v638 = vunpack.c.l.b16 %v158
    %v639 = vunpack.c.l.b16 %v159
    %v640 = vunpack.c.l.b16 %v160
    %v641 = vunpack.c.l.b16 %v161
    %v642 = vunpack.c.l.b16 %v162
    %v643 = vunpack.c.l.b16 %v163
    %v644 = vunpack.c.l.b16 %v164
    %v645 = vunpack.c.l.b16 %v165
    %v646 = vunpack.c.l.b16 %v166
    %v647 = vunpack.c.l.b16 %v167
    %v648 = vunpack.c.l.b16 %v168
    %v649 = vunpack.c.l.b16 %v169
    %v650 = vunpack.c.l.b16 %v170
    %v651 = vunpack.c.l.b16 %v171
    %v652 = vunpack.c.l.b16 %v172
    %v653 = vunpack.c.l.b16 %v173
    %v654 = vpack.c.b16 %v639, %v638
    %v655 = vpack.c.b16 %v641, %v640
    %v656 = vpack.c.b16 %v643, %v642
    %v657 = vpack.c.b16 %v645, %v644
    %v658 = vpack.c.b16 %v647, %v646
    %v659 = vpack.c.b16 %v649, %v648
    %v660 = vpack.c.b16 %v651, %v650
    %v661 = vpack.c.b16 %v653, %v652
    %670 = vmatprep.subr.bf16.mxu0 0
    %671 = vmatpush1.bf16.msra.mxu0 %v614
    %672 = vmatprep.subr.bf16.mxu0 0
    %673 = vmatpush1.bf16.msra.mxu0 %v615
    %674 = vmatprep.subr.bf16.mxu0 0
    %675 = vmatpush1.bf16.msra.mxu0 %v616
    %676 = vmatprep.subr.bf16.mxu0 0
    %677 = vmatpush1.bf16.msra.mxu0 %v617
    %678 = vmatprep.subr.bf16.mxu0 0
    %679 = vmatpush1.bf16.msra.mxu0 %v618
    %680 = vmatprep.subr.bf16.mxu0 0
    %681 = vmatpush1.bf16.msra.mxu0 %v619
    %682 = vmatprep.subr.bf16.mxu0 0
    %683 = vmatpush1.bf16.msra.mxu0 %v620
    %684 = vmatprep.subr.bf16.mxu0 0
    %685 = vmatpush1.bf16.msra.mxu0 %v621
    %686 = vmatprep.subr.bf16.mxu0 0
    %687 = vmatpush1.bf16.msra.mxu0 0
    %688 = vmatprep.subr.bf16.mxu0 0
    %689 = vmatpush1.bf16.msra.mxu0 0
    %690 = vmatprep.subr.bf16.mxu0 0
    %691 = vmatpush1.bf16.msra.mxu0 0
    %692 = vmatprep.subr.bf16.mxu0 0
    %693 = vmatpush1.bf16.msra.mxu0 0
    %694 = vmatprep.subr.bf16.mxu0 0
    %695 = vmatpush1.bf16.msra.mxu0 0
    %696 = vmatprep.subr.bf16.mxu0 0
    %697 = vmatpush1.bf16.msra.mxu0 0
    %698 = vmatprep.subr.bf16.mxu0 0
    %699 = vmatpush1.bf16.msra.mxu0 0
    %700 = vmatprep.subr.bf16.mxu0 0
    %701 = vmatpush1.bf16.msra.mxu0 0
    %702 = vmatprep.mubr.bf16.mxu0 0
    %703 = vmatmul.mubr.bf16.gmra.mrb[0].mxu0 %v654
    %v704 = vpop.f32.mrb[0].mxu0
    %v705 = vadd.f32 0.0, %v704
    %v706 = vpop.f32.mrb[0].mxu0
    %v707 = vpop.f32.mrb[0].mxu0
    %v708 = vadd.f32 0.0, %v707
    %v709 = vpop.f32.mrb[0].mxu0
    %710 = vmatprep.mubr.bf16.mxu0 0
    %711 = vmatmul.mubr.bf16.gmra.mrb[0].mxu0 %v655
    %v712 = vpop.f32.mrb[0].mxu0
    %v713 = vadd.f32 0.0, %v712
    %v714 = vpop.f32.mrb[0].mxu0
    %v715 = vpop.f32.mrb[0].mxu0
    %v716 = vadd.f32 0.0, %v715
    %v717 = vpop.f32.mrb[0].mxu0
    %718 = vmatprep.mubr.bf16.mxu0 0
    %719 = vmatmul.mubr.bf16.gmra.mrb[0].mxu0 %v656
    %v720 = vpop.f32.mrb[0].mxu0
    %v721 = vadd.f32 0.0, %v720
    %v722 = vpop.f32.mrb[0].mxu0
    %v723 = vpop.f32.mrb[0].mxu0
    %v724 = vadd.f32 0.0, %v723
    %v725 = vpop.f32.mrb[0].mxu0
    %726 = vmatprep.mubr.bf16.mxu0 0
    %727 = vmatmul.mubr.bf16.gmra.mrb[0].mxu0 %v657
    %v728 = vpop.f32.mrb[0].mxu0
    %v729 = vadd.f32 0.0, %v728
    %v730 = vpop.f32.mrb[0].mxu0
    %v731 = vpop.f32.mrb[0].mxu0
    %v732 = vadd.f32 0.0, %v731
    %v733 = vpop.f32.mrb[0].mxu0
    %734 = vmatprep.mubr.bf16.mxu0 0
    %735 = vmatmul.mubr.bf16.gmra.mrb[0].mxu0 %v658
    %v736 = vpop.f32.mrb[0].mxu0
    %v737 = vadd.f32 0.0, %v736
    %v738 = vpop.f32.mrb[0].mxu0
    %v739 = vpop.f32.mrb[0].mxu0
    %v740 = vadd.f32 0.0, %v739
    %v741 = vpop.f32.mrb[0].mxu0
    %742 = vmatprep.mubr.bf16.mxu0 0
    %743 = vmatmul.mubr.bf16.gmra.mrb[0].mxu0 %v659
    %v744 = vpop.f32.mrb[0].mxu0
    %v745 = vadd.f32 0.0, %v744
    %v746 = vpop.f32.mrb[0].mxu0
    %v747 = vpop.f32.mrb[0].mxu0
    %v748 = vadd.f32 0.0, %v747
    %v749 = vpop.f32.mrb[0].mxu0
    %750 = vmatprep.mubr.bf16.mxu0 0
    %751 = vmatmul.mubr.bf16.gmra.mrb[0].mxu0 %v660
    %v752 = vpop.f32.mrb[0].mxu0
    %v753 = vadd.f32 0.0, %v752
    %v754 = vpop.f32.mrb[0].mxu0
    %v755 = vpop.f32.mrb[0].mxu0
    %v756 = vadd.f32 0.0, %v755
    %v757 = vpop.f32.mrb[0].mxu0
    %758 = vmatprep.mubr.bf16.mxu0 0
    %759 = vmatmul.mubr.bf16.gmra.mrb[0].mxu0 %v661
    %v760 = vpop.f32.mrb[0].mxu0
    %v761 = vadd.f32 0.0, %v760
    %v762 = vpop.f32.mrb[0].mxu0
    %v763 = vpop.f32.mrb[0].mxu0
    %v764 = vadd.f32 0.0, %v763
    %v765 = vpop.f32.mrb[0].mxu0
    %766 = vdwg.mxu0
    %v767 = vpack.c.bf16 %v708, %v705
    %v768 = vpack.c.bf16 %v716, %v713
    %v769 = vpack.c.bf16 %v724, %v721
    %v770 = vpack.c.bf16 %v732, %v729
    %v771 = vpack.c.bf16 %v740, %v737
    %v772 = vpack.c.bf16 %v748, %v745
    %v773 = vpack.c.bf16 %v756, %v753
    %v774 = vpack.c.bf16 %v764, %v761
    %775 = vmatprep.subr.bf16.mxu0 0
    %776 = vmatpush1.bf16.msra.mxu0 %v767
    %777 = vmatprep.subr.bf16.mxu0 0
    %778 = vmatpush1.bf16.msra.mxu0 %v768
    %779 = vmatprep.subr.bf16.mxu0 0
    %780 = vmatpush1.bf16.msra.mxu0 %v769
    %781 = vmatprep.subr.bf16.mxu0 0
    %782 = vmatpush1.bf16.msra.mxu0 %v770
    %783 = vmatprep.subr.bf16.mxu0 0
    %784 = vmatpush1.bf16.msra.mxu0 %v771
    %785 = vmatprep.subr.bf16.mxu0 0
    %786 = vmatpush1.bf16.msra.mxu0 %v772
    %787 = vmatprep.subr.bf16.mxu0 0
    %788 = vmatpush1.bf16.msra.mxu0 %v773
    %789 = vmatprep.subr.bf16.mxu0 0
    %790 = vmatpush1.bf16.msra.mxu0 %v774
    %791 = vmatprep.subr.bf16.mxu0 0
    %792 = vmatpush1.bf16.msra.mxu0 0
    %793 = vmatprep.subr.bf16.mxu0 0
    %794 = vmatpush1.bf16.msra.mxu0 0
    %795 = vmatprep.subr.bf16.mxu0 0
    %796 = vmatpush1.bf16.msra.mxu0 0
    %797 = vmatprep.subr.bf16.mxu0 0
    %798 = vmatpush1.bf16.msra.mxu0 0
    %799 = vmatprep.subr.bf16.mxu0 0
    %800 = vmatpush1.bf16.msra.mxu0 0
    %801 = vmatprep.subr.bf16.mxu0 0
    %802 = vmatpush1.bf16.msra.mxu0 0
    %803 = vmatprep.subr.bf16.mxu0 0
    %804 = vmatpush1.bf16.msra.mxu0 0
    %805 = vmatprep.subr.bf16.mxu0 0
    %806 = vmatpush1.bf16.msra.mxu0 0
    %807 = vmatprep.mubr.bf16.mxu0 0
    %808 = vmatmul.mubr.bf16.gmra.mrb[0].mxu0 %v654
    %v809 = vpop.f32.mrb[0].mxu0
    %v810 = vadd.f32 0.0, %v809
    %v811 = vpop.f32.mrb[0].mxu0
    %v812 = vpop.f32.mrb[0].mxu0
    %v813 = vadd.f32 0.0, %v812
    %v814 = vpop.f32.mrb[0].mxu0
    %815 = vmatprep.mubr.bf16.mxu0 0
    %816 = vmatmul.mubr.bf16.gmra.mrb[0].mxu0 %v655
    %v817 = vpop.f32.mrb[0].mxu0
    %v818 = vadd.f32 0.0, %v817
    %v819 = vpop.f32.mrb[0].mxu0
    %v820 = vpop.f32.mrb[0].mxu0
    %v821 = vadd.f32 0.0, %v820
    %v822 = vpop.f32.mrb[0].mxu0
    %823 = vmatprep.mubr.bf16.mxu0 0
    %824 = vmatmul.mubr.bf16.gmra.mrb[0].mxu0 %v656
    %v825 = vpop.f32.mrb[0].mxu0
    %v826 = vadd.f32 0.0, %v825
    %v827 = vpop.f32.mrb[0].mxu0
    %v828 = vpop.f32.mrb[0].mxu0
    %v829 = vadd.f32 0.0, %v828
    %v830 = vpop.f32.mrb[0].mxu0
    %831 = vmatprep.mubr.bf16.mxu0 0
    %832 = vmatmul.mubr.bf16.gmra.mrb[0].mxu0 %v657
    %v833 = vpop.f32.mrb[0].mxu0
    %v834 = vadd.f32 0.0, %v833
    %v835 = vpop.f32.mrb[0].mxu0
    %v836 = vpop.f32.mrb[0].mxu0
    %v837 = vadd.f32 0.0, %v836
    %v838 = vpop.f32.mrb[0].mxu0
    %839 = vmatprep.mubr.bf16.mxu0 0
    %840 = vmatmul.mubr.bf16.gmra.mrb[0].mxu0 %v658
    %v841 = vpop.f32.mrb[0].mxu0
    %v842 = vadd.f32 0.0, %v841
    %v843 = vpop.f32.mrb[0].mxu0
    %v844 = vpop.f32.mrb[0].mxu0
    %v845 = vadd.f32 0.0, %v844
    %v846 = vpop.f32.mrb[0].mxu0
    %847 = vmatprep.mubr.bf16.mxu0 0
    %848 = vmatmul.mubr.bf16.gmra.mrb[0].mxu0 %v659
    %v849 = vpop.f32.mrb[0].mxu0
    %v850 = vadd.f32 0.0, %v849
    %v851 = vpop.f32.mrb[0].mxu0
    %v852 = vpop.f32.mrb[0].mxu0
    %v853 = vadd.f32 0.0, %v852
    %v854 = vpop.f32.mrb[0].mxu0
    %855 = vmatprep.mubr.bf16.mxu0 0
    %856 = vmatmul.mubr.bf16.gmra.mrb[0].mxu0 %v660
    %v857 = vpop.f32.mrb[0].mxu0
    %v858 = vadd.f32 0.0, %v857
    %v859 = vpop.f32.mrb[0].mxu0
    %v860 = vpop.f32.mrb[0].mxu0
    %v861 = vadd.f32 0.0, %v860
    %v862 = vpop.f32.mrb[0].mxu0
    %863 = vmatprep.mubr.bf16.mxu0 0
    %864 = vmatmul.mubr.bf16.gmra.mrb[0].mxu0 %v661
    %v865 = vpop.f32.mrb[0].mxu0
    %v866 = vadd.f32 0.0, %v865
    %v867 = vpop.f32.mrb[0].mxu0
    %v868 = vpop.f32.mrb[0].mxu0
    %v869 = vadd.f32 0.0, %v868
    %v870 = vpop.f32.mrb[0].mxu0
    %871 = vdwg.mxu0
    %v872 = vmul.f32 %v810, 2.0
    %v873 = vmul.f32 %v813, 2.0
    %v874 = vmul.f32 %v818, 2.0
    %v875 = vmul.f32 %v821, 2.0
    %v876 = vmul.f32 %v826, 2.0
    %v877 = vmul.f32 %v829, 2.0
    %v878 = vmul.f32 %v834, 2.0
    %v879 = vmul.f32 %v837, 2.0
    %v880 = vmul.f32 %v842, 2.0
    %v881 = vmul.f32 %v845, 2.0
    %v882 = vmul.f32 %v850, 2.0
    %v883 = vmul.f32 %v853, 2.0
    %v884 = vmul.f32 %v858, 2.0
    %v885 = vmul.f32 %v861, 2.0
    %v886 = vmul.f32 %v866, 2.0
    %v887 = vmul.f32 %v869, 2.0
    %v888 = vsub.f32 %v872, %v598
    %v889 = vsub.f32 %v873, %v599
    %v890 = vsub.f32 %v874, %v600
    %v891 = vsub.f32 %v875, %v601
    %v892 = vsub.f32 %v876, %v602
    %v893 = vsub.f32 %v877, %v603
    %v894 = vsub.f32 %v878, %v604
    %v895 = vsub.f32 %v879, %v605
    %v896 = vsub.f32 %v880, %v606
    %v897 = vsub.f32 %v881, %v607
    %v898 = vsub.f32 %v882, %v608
    %v899 = vsub.f32 %v883, %v609
    %v900 = vsub.f32 %v884, %v610
    %v901 = vsub.f32 %v885, %v611
    %v902 = vsub.f32 %v886, %v612
    %v903 = vsub.f32 %v887, %v613
    %v904 = vpack.c.bf16 %v889, %v888
    %v905 = vpack.c.bf16 %v891, %v890
    %v906 = vpack.c.bf16 %v893, %v892
    %v907 = vpack.c.bf16 %v895, %v894
    %v908 = vpack.c.bf16 %v897, %v896
    %v909 = vpack.c.bf16 %v899, %v898
    %v910 = vpack.c.bf16 %v901, %v900
    %v911 = vpack.c.bf16 %v903, %v902
    %v912 = vld [vmem:[#allocation10] sm:$0xf]
    %v913 = vld [vmem:[#allocation10 + $0x4] sm:$0xf]
    %v914 = vld [vmem:[#allocation10 + $0x8] sm:$0xf]
    %v915 = vld [vmem:[#allocation10 + $0xc] sm:$0xf]
    %v916 = vld [vmem:[#allocation10 + $0x10] sm:$0xf]
    %v917 = vld [vmem:[#allocation10 + $0x14] sm:$0xf]
    %v918 = vld [vmem:[#allocation10 + $0x18] sm:$0xf]
    %v919 = vld [vmem:[#allocation10 + $0x1c] sm:$0xf]
    %v920 = vld [vmem:[#allocation10 + $0x20] sm:$0xf]
    %v921 = vld [vmem:[#allocation10 + $0x24] sm:$0xf]
    %v922 = vld [vmem:[#allocation10 + $0x28] sm:$0xf]
    %v923 = vld [vmem:[#allocation10 + $0x2c] sm:$0xf]
    %v924 = vld [vmem:[#allocation10 + $0x30] sm:$0xf]
    %v925 = vld [vmem:[#allocation10 + $0x34] sm:$0xf]
    %v926 = vld [vmem:[#allocation10 + $0x38] sm:$0xf]
    %v927 = vld [vmem:[#allocation10 + $0x3c] sm:$0xf]
    %v928 = vld [vmem:[#allocation10 + $0x40] sm:$0xf]
    %v929 = vld [vmem:[#allocation10 + $0x44] sm:$0xf]
    %v930 = vld [vmem:[#allocation10 + $0x48] sm:$0xf]
    %v931 = vld [vmem:[#allocation10 + $0x4c] sm:$0xf]
    %v932 = vld [vmem:[#allocation10 + $0x50] sm:$0xf]
    %v933 = vld [vmem:[#allocation10 + $0x54] sm:$0xf]
    %v934 = vld [vmem:[#allocation10 + $0x58] sm:$0xf]
    %v935 = vld [vmem:[#allocation10 + $0x5c] sm:$0xf]
    %v936 = vld [vmem:[#allocation10 + $0x60] sm:$0xf]
    %v937 = vld [vmem:[#allocation10 + $0x64] sm:$0xf]
    %v938 = vld [vmem:[#allocation10 + $0x68] sm:$0xf]
    %v939 = vld [vmem:[#allocation10 + $0x6c] sm:$0xf]
    %v940 = vld [vmem:[#allocation10 + $0x70] sm:$0xf]
    %v941 = vld [vmem:[#allocation10 + $0x74] sm:$0xf]
    %v942 = vld [vmem:[#allocation10 + $0x78] sm:$0xf]
    %v943 = vld [vmem:[#allocation10 + $0x7c] sm:$0xf]
    %v944 = vld [vmem:[#allocation10 + $0x80] sm:$0xf]
    %v945 = vld [vmem:[#allocation10 + $0x84] sm:$0xf]
    %v946 = vld [vmem:[#allocation10 + $0x88] sm:$0xf]
    %v947 = vld [vmem:[#allocation10 + $0x8c] sm:$0xf]
    %v948 = vld [vmem:[#allocation10 + $0x90] sm:$0xf]
    %v949 = vld [vmem:[#allocation10 + $0x94] sm:$0xf]
    %v950 = vld [vmem:[#allocation10 + $0x98] sm:$0xf]
    %v951 = vld [vmem:[#allocation10 + $0x9c] sm:$0xf]
    %v952 = vld [vmem:[#allocation10 + $0xa0] sm:$0xf]
    %v953 = vld [vmem:[#allocation10 + $0xa4] sm:$0xf]
    %v954 = vld [vmem:[#allocation10 + $0xa8] sm:$0xf]
    %v955 = vld [vmem:[#allocation10 + $0xac] sm:$0xf]
    %v956 = vld [vmem:[#allocation10 + $0xb0] sm:$0xf]
    %v957 = vld [vmem:[#allocation10 + $0xb4] sm:$0xf]
    %v958 = vld [vmem:[#allocation10 + $0xb8] sm:$0xf]
    %v959 = vld [vmem:[#allocation10 + $0xbc] sm:$0xf]
    %v960 = vld [vmem:[%s7] sm:$0x1]
    %v962 = vlaneseq
    %v963 = vshrl.u32 %v962, 7
    %v964 = vsub.s32 0, %v963
    %v965 = vrot.slane %v960, %v964
    %v1015 = vunpack.c.l.b16 %v912
    %v1016 = vunpack.c.l.b16 %v913
    %v1017 = vunpack.c.l.b16 %v914
    %v1018 = vunpack.c.l.b16 %v915
    %v1019 = vunpack.c.l.b16 %v916
    %v1020 = vunpack.c.l.b16 %v917
    %v1021 = vunpack.c.l.b16 %v918
    %v1022 = vunpack.c.l.b16 %v919
    %v1023 = vunpack.c.l.b16 %v920
    %v1024 = vunpack.c.l.b16 %v921
    %v1025 = vunpack.c.l.b16 %v922
    %v1026 = vunpack.c.l.b16 %v923
    %v1027 = vunpack.c.l.b16 %v924
    %v1028 = vunpack.c.l.b16 %v925
    %v1029 = vunpack.c.l.b16 %v926
    %v1030 = vunpack.c.l.b16 %v927
    %v1031 = vunpack.c.l.b16 %v928
    %v1032 = vunpack.c.l.b16 %v929
    %v1033 = vunpack.c.l.b16 %v930
    %v1034 = vunpack.c.l.b16 %v931
    %v1035 = vunpack.c.l.b16 %v932
    %v1036 = vunpack.c.l.b16 %v933
    %v1037 = vunpack.c.l.b16 %v934
    %v1038 = vunpack.c.l.b16 %v935
    %v1039 = vunpack.c.l.b16 %v936
    %v1040 = vunpack.c.l.b16 %v937
    %v1041 = vunpack.c.l.b16 %v938
    %v1042 = vunpack.c.l.b16 %v939
    %v1043 = vunpack.c.l.b16 %v940
    %v1044 = vunpack.c.l.b16 %v941
    %v1045 = vunpack.c.l.b16 %v942
    %v1046 = vunpack.c.l.b16 %v943
    %v1047 = vunpack.c.l.b16 %v944
    %v1048 = vunpack.c.l.b16 %v945
    %v1049 = vunpack.c.l.b16 %v946
    %v1050 = vunpack.c.l.b16 %v947
    %v1051 = vunpack.c.l.b16 %v948
    %v1052 = vunpack.c.l.b16 %v949
    %v1053 = vunpack.c.l.b16 %v950
    %v1054 = vunpack.c.l.b16 %v951
    %v1055 = vunpack.c.l.b16 %v952
    %v1056 = vunpack.c.l.b16 %v953
    %v1057 = vunpack.c.l.b16 %v954
    %v1058 = vunpack.c.l.b16 %v955
    %v1059 = vunpack.c.l.b16 %v956
    %v1060 = vunpack.c.l.b16 %v957
    %v1061 = vunpack.c.l.b16 %v958
    %v1062 = vunpack.c.l.b16 %v959
    %v1063 = vpack.c.b16 %v1016, %v1015
    %v1064 = vpack.c.b16 %v1018, %v1017
    %v1065 = vpack.c.b16 %v1020, %v1019
    %v1066 = vpack.c.b16 %v1022, %v1021
    %v1067 = vpack.c.b16 %v1024, %v1023
    %v1068 = vpack.c.b16 %v1026, %v1025
    %v1069 = vpack.c.b16 %v1028, %v1027
    %v1070 = vpack.c.b16 %v1030, %v1029
    %v1071 = vpack.c.b16 %v1032, %v1031
    %v1072 = vpack.c.b16 %v1034, %v1033
    %v1073 = vpack.c.b16 %v1036, %v1035
    %v1074 = vpack.c.b16 %v1038, %v1037
    %v1075 = vpack.c.b16 %v1040, %v1039
    %v1076 = vpack.c.b16 %v1042, %v1041
    %v1077 = vpack.c.b16 %v1044, %v1043
    %v1078 = vpack.c.b16 %v1046, %v1045
    %v1079 = vpack.c.b16 %v1048, %v1047
    %v1080 = vpack.c.b16 %v1050, %v1049
    %v1081 = vpack.c.b16 %v1052, %v1051
    %v1082 = vpack.c.b16 %v1054, %v1053
    %v1083 = vpack.c.b16 %v1056, %v1055
    %v1084 = vpack.c.b16 %v1058, %v1057
    %v1085 = vpack.c.b16 %v1060, %v1059
    %v1086 = vpack.c.b16 %v1062, %v1061
    %1111 = vmatprep.subr.bf16.mxu0 0
    %1112 = vmatpush1.bf16.msra.mxu0 %v1063
    %1113 = vmatprep.subr.bf16.mxu0 0
    %1114 = vmatpush1.bf16.msra.mxu0 %v1064
    %1115 = vmatprep.subr.bf16.mxu0 0
    %1116 = vmatpush1.bf16.msra.mxu0 %v1065
    %1117 = vmatprep.subr.bf16.mxu0 0
    %1118 = vmatpush1.bf16.msra.mxu0 %v1066
    %1119 = vmatprep.subr.bf16.mxu0 0
    %1120 = vmatpush1.bf16.msra.mxu0 %v1067
    %1121 = vmatprep.subr.bf16.mxu0 0
    %1122 = vmatpush1.bf16.msra.mxu0 %v1068
    %1123 = vmatprep.subr.bf16.mxu0 0
    %1124 = vmatpush1.bf16.msra.mxu0 %v1069
    %1125 = vmatprep.subr.bf16.mxu0 0
    %1126 = vmatpush1.bf16.msra.mxu0 %v1070
    %1127 = vmatprep.subr.bf16.mxu0 0
    %1128 = vmatpush1.bf16.msra.mxu0 %v1071
    %1129 = vmatprep.subr.bf16.mxu0 0
    %1130 = vmatpush1.bf16.msra.mxu0 %v1072
    %1131 = vmatprep.subr.bf16.mxu0 0
    %1132 = vmatpush1.bf16.msra.mxu0 %v1073
    %1133 = vmatprep.subr.bf16.mxu0 0
    %1134 = vmatpush1.bf16.msra.mxu0 %v1074
    %1135 = vmatprep.subr.bf16.mxu0 0
    %1136 = vmatpush1.bf16.msra.mxu0 %v1075
    %1137 = vmatprep.subr.bf16.mxu0 0
    %1138 = vmatpush1.bf16.msra.mxu0 %v1076
    %1139 = vmatprep.subr.bf16.mxu0 0
    %1140 = vmatpush1.bf16.msra.mxu0 %v1077
    %1141 = vmatprep.subr.bf16.mxu0 0
    %1142 = vmatpush1.bf16.msra.mxu0 %v1078
    %1143 = vmatprep.mubr.bf16.mxu0 %v767
    %1144 = vmatmul.mubr.bf16.gmra.mrb[0].mxu0 %v614
    %v1145 = vpop.f32.mrb[0].mxu0
    %v1146 = vadd.f32 %v965, %v1145
    %v1147 = vpop.f32.mrb[0].mxu0
    %v1148 = vpop.f32.mrb[0].mxu0
    %v1149 = vadd.f32 %v965, %v1148
    %v1150 = vpop.f32.mrb[0].mxu0
    %1151 = vmatprep.mubr.bf16.mxu0 %v768
    %1152 = vmatmul.mubr.bf16.gmra.mrb[0].mxu0 %v615
    %v1153 = vpop.f32.mrb[0].mxu0
    %v1154 = vadd.f32 %v965, %v1153
    %v1155 = vpop.f32.mrb[0].mxu0
    %v1156 = vpop.f32.mrb[0].mxu0
    %v1157 = vadd.f32 %v965, %v1156
    %v1158 = vpop.f32.mrb[0].mxu0
    %1159 = vmatprep.mubr.bf16.mxu0 %v769
    %1160 = vmatmul.mubr.bf16.gmra.mrb[0].mxu0 %v616
    %v1161 = vpop.f32.mrb[0].mxu0
    %v1162 = vadd.f32 %v965, %v1161
    %v1163 = vpop.f32.mrb[0].mxu0
    %v1164 = vpop.f32.mrb[0].mxu0
    %v1165 = vadd.f32 %v965, %v1164
    %v1166 = vpop.f32.mrb[0].mxu0
    %1167 = vmatprep.mubr.bf16.mxu0 %v770
    %1168 = vmatmul.mubr.bf16.gmra.mrb[0].mxu0 %v617
    %v1169 = vpop.f32.mrb[0].mxu0
    %v1170 = vadd.f32 %v965, %v1169
    %v1171 = vpop.f32.mrb[0].mxu0
    %v1172 = vpop.f32.mrb[0].mxu0
    %v1173 = vadd.f32 %v965, %v1172
    %v1174 = vpop.f32.mrb[0].mxu0
    %1175 = vmatprep.mubr.bf16.mxu0 %v771
    %1176 = vmatmul.mubr.bf16.gmra.mrb[0].mxu0 %v618
    %v1177 = vpop.f32.mrb[0].mxu0
    %v1178 = vadd.f32 %v965, %v1177
    %v1179 = vpop.f32.mrb[0].mxu0
    %v1180 = vpop.f32.mrb[0].mxu0
    %v1181 = vadd.f32 %v965, %v1180
    %v1182 = vpop.f32.mrb[0].mxu0
    %1183 = vmatprep.mubr.bf16.mxu0 %v772
    %1184 = vmatmul.mubr.bf16.gmra.mrb[0].mxu0 %v619
    %v1185 = vpop.f32.mrb[0].mxu0
    %v1186 = vadd.f32 %v965, %v1185
    %v1187 = vpop.f32.mrb[0].mxu0
    %v1188 = vpop.f32.mrb[0].mxu0
    %v1189 = vadd.f32 %v965, %v1188
    %v1190 = vpop.f32.mrb[0].mxu0
    %1191 = vmatprep.mubr.bf16.mxu0 %v773
    %1192 = vmatmul.mubr.bf16.gmra.mrb[0].mxu0 %v620
    %v1193 = vpop.f32.mrb[0].mxu0
    %v1194 = vadd.f32 %v965, %v1193
    %v1195 = vpop.f32.mrb[0].mxu0
    %v1196 = vpop.f32.mrb[0].mxu0
    %v1197 = vadd.f32 %v965, %v1196
    %v1198 = vpop.f32.mrb[0].mxu0
    %1199 = vmatprep.mubr.bf16.mxu0 %v774
    %1200 = vmatmul.mubr.bf16.gmra.mrb[0].mxu0 %v621
    %v1201 = vpop.f32.mrb[0].mxu0
    %v1202 = vadd.f32 %v965, %v1201
    %v1203 = vpop.f32.mrb[0].mxu0
    %v1204 = vpop.f32.mrb[0].mxu0
    %v1205 = vadd.f32 %v965, %v1204
    %v1206 = vpop.f32.mrb[0].mxu0
    %1207 = vdwg.mxu0
    %1208 = vmatprep.subr.bf16.mxu0 0
    %1209 = vmatpush1.bf16.msra.mxu0 %v1079
    %1210 = vmatprep.subr.bf16.mxu0 0
    %1211 = vmatpush1.bf16.msra.mxu0 %v1080
    %1212 = vmatprep.subr.bf16.mxu0 0
    %1213 = vmatpush1.bf16.msra.mxu0 %v1081
    %1214 = vmatprep.subr.bf16.mxu0 0
    %1215 = vmatpush1.bf16.msra.mxu0 %v1082
    %1216 = vmatprep.subr.bf16.mxu0 0
    %1217 = vmatpush1.bf16.msra.mxu0 %v1083
    %1218 = vmatprep.subr.bf16.mxu0 0
    %1219 = vmatpush1.bf16.msra.mxu0 %v1084
    %1220 = vmatprep.subr.bf16.mxu0 0
    %1221 = vmatpush1.bf16.msra.mxu0 %v1085
    %1222 = vmatprep.subr.bf16.mxu0 0
    %1223 = vmatpush1.bf16.msra.mxu0 %v1086
    %1224 = vmatprep.subr.bf16.mxu0 0
    %1225 = vmatpush1.bf16.msra.mxu0 0
    %1226 = vmatprep.subr.bf16.mxu0 0
    %1227 = vmatpush1.bf16.msra.mxu0 0
    %1228 = vmatprep.subr.bf16.mxu0 0
    %1229 = vmatpush1.bf16.msra.mxu0 0
    %1230 = vmatprep.subr.bf16.mxu0 0
    %1231 = vmatpush1.bf16.msra.mxu0 0
    %1232 = vmatprep.subr.bf16.mxu0 0
    %1233 = vmatpush1.bf16.msra.mxu0 0
    %1234 = vmatprep.subr.bf16.mxu0 0
    %1235 = vmatpush1.bf16.msra.mxu0 0
    %1236 = vmatprep.subr.bf16.mxu0 0
    %1237 = vmatpush1.bf16.msra.mxu0 0
    %1238 = vmatprep.subr.bf16.mxu0 0
    %1239 = vmatpush1.bf16.msra.mxu0 0
    %1240 = vmatprep.mubr.bf16.mxu0 0
    %1241 = vmatmul.mubr.bf16.gmra.mrb[0].mxu0 %v904
    %v1242 = vpop.f32.mrb[0].mxu0
    %v1243 = vadd.f32 %v1146, %v1242
    %v1244 = vpop.f32.mrb[0].mxu0
    %v1245 = vpop.f32.mrb[0].mxu0
    %v1246 = vadd.f32 %v1149, %v1245
    %v1247 = vpop.f32.mrb[0].mxu0
    %1248 = vmatprep.mubr.bf16.mxu0 0
    %1249 = vmatmul.mubr.bf16.gmra.mrb[0].mxu0 %v905
    %v1250 = vpop.f32.mrb[0].mxu0
    %v1251 = vadd.f32 %v1154, %v1250
    %v1252 = vpop.f32.mrb[0].mxu0
    %v1253 = vpop.f32.mrb[0].mxu0
    %v1254 = vadd.f32 %v1157, %v1253
    %v1255 = vpop.f32.mrb[0].mxu0
    %1256 = vmatprep.mubr.bf16.mxu0 0
    %1257 = vmatmul.mubr.bf16.gmra.mrb[0].mxu0 %v906
    %v1258 = vpop.f32.mrb[0].mxu0
    %v1259 = vadd.f32 %v1162, %v1258
    %v1260 = vpop.f32.mrb[0].mxu0
    %v1261 = vpop.f32.mrb[0].mxu0
    %v1262 = vadd.f32 %v1165, %v1261
    %v1263 = vpop.f32.mrb[0].mxu0
    %1264 = vmatprep.mubr.bf16.mxu0 0
    %1265 = vmatmul.mubr.bf16.gmra.mrb[0].mxu0 %v907
    %v1266 = vpop.f32.mrb[0].mxu0
    %v1267 = vadd.f32 %v1170, %v1266
    %v1268 = vpop.f32.mrb[0].mxu0
    %v1269 = vpop.f32.mrb[0].mxu0
    %v1270 = vadd.f32 %v1173, %v1269
    %v1271 = vpop.f32.mrb[0].mxu0
    %1272 = vmatprep.mubr.bf16.mxu0 0
    %1273 = vmatmul.mubr.bf16.gmra.mrb[0].mxu0 %v908
    %v1274 = vpop.f32.mrb[0].mxu0
    %v1275 = vadd.f32 %v1178, %v1274
    %v1276 = vpop.f32.mrb[0].mxu0
    %v1277 = vpop.f32.mrb[0].mxu0
    %v1278 = vadd.f32 %v1181, %v1277
    %v1279 = vpop.f32.mrb[0].mxu0
    %1280 = vmatprep.mubr.bf16.mxu0 0
    %1281 = vmatmul.mubr.bf16.gmra.mrb[0].mxu0 %v909
    %v1282 = vpop.f32.mrb[0].mxu0
    %v1283 = vadd.f32 %v1186, %v1282
    %v1284 = vpop.f32.mrb[0].mxu0
    %v1285 = vpop.f32.mrb[0].mxu0
    %v1286 = vadd.f32 %v1189, %v1285
    %v1287 = vpop.f32.mrb[0].mxu0
    %1288 = vmatprep.mubr.bf16.mxu0 0
    %1289 = vmatmul.mubr.bf16.gmra.mrb[0].mxu0 %v910
    %v1290 = vpop.f32.mrb[0].mxu0
    %v1291 = vadd.f32 %v1194, %v1290
    %v1292 = vpop.f32.mrb[0].mxu0
    %v1293 = vpop.f32.mrb[0].mxu0
    %v1294 = vadd.f32 %v1197, %v1293
    %v1295 = vpop.f32.mrb[0].mxu0
    %1296 = vmatprep.mubr.bf16.mxu0 0
    %1297 = vmatmul.mubr.bf16.gmra.mrb[0].mxu0 %v911
    %v1298 = vpop.f32.mrb[0].mxu0
    %v1299 = vadd.f32 %v1202, %v1298
    %v1300 = vpop.f32.mrb[0].mxu0
    %v1301 = vpop.f32.mrb[0].mxu0
    %v1302 = vadd.f32 %v1205, %v1301
    %v1303 = vpop.f32.mrb[0].mxu0
    %1304 = vdwg.mxu0
    %v1305 = vmax.f32 %v1243, 0.0
    %v1306 = vmax.f32 %v1246, 0.0
    %v1307 = vmax.f32 %v1251, 0.0
    %v1308 = vmax.f32 %v1254, 0.0
    %v1309 = vmax.f32 %v1259, 0.0
    %v1310 = vmax.f32 %v1262, 0.0
    %v1311 = vmax.f32 %v1267, 0.0
    %v1312 = vmax.f32 %v1270, 0.0
    %v1313 = vmax.f32 %v1275, 0.0
    %v1314 = vmax.f32 %v1278, 0.0
    %v1315 = vmax.f32 %v1283, 0.0
    %v1316 = vmax.f32 %v1286, 0.0
    %v1317 = vmax.f32 %v1291, 0.0
    %v1318 = vmax.f32 %v1294, 0.0
    %v1319 = vmax.f32 %v1299, 0.0
    %v1320 = vmax.f32 %v1302, 0.0
    %v1321 = vpack.c.bf16 %v1306, %v1305
    %v1322 = vpack.c.bf16 %v1308, %v1307
    %v1323 = vpack.c.bf16 %v1310, %v1309
    %v1324 = vpack.c.bf16 %v1312, %v1311
    %v1325 = vpack.c.bf16 %v1314, %v1313
    %v1326 = vpack.c.bf16 %v1316, %v1315
    %v1327 = vpack.c.bf16 %v1318, %v1317
    %v1328 = vpack.c.bf16 %v1320, %v1319
    %1329 = vmatprep.subr.bf16.mxu0 0
    %1330 = vmatpush1.bf16.msra.mxu0 %v1321
    %1331 = vmatprep.subr.bf16.mxu0 0
    %1332 = vmatpush1.bf16.msra.mxu0 %v1322
    %1333 = vmatprep.subr.bf16.mxu0 0
    %1334 = vmatpush1.bf16.msra.mxu0 %v1323
    %1335 = vmatprep.subr.bf16.mxu0 0
    %1336 = vmatpush1.bf16.msra.mxu0 %v1324
    %1337 = vmatprep.subr.bf16.mxu0 0
    %1338 = vmatpush1.bf16.msra.mxu0 %v1325
    %1339 = vmatprep.subr.bf16.mxu0 0
    %1340 = vmatpush1.bf16.msra.mxu0 %v1326
    %1341 = vmatprep.subr.bf16.mxu0 0
    %1342 = vmatpush1.bf16.msra.mxu0 %v1327
    %1343 = vmatprep.subr.bf16.mxu0 0
    %1344 = vmatpush1.bf16.msra.mxu0 %v1328
    %1345 = vmatprep.subr.bf16.mxu0 0
    %1346 = vmatpush1.bf16.msra.mxu0 0
    %1347 = vmatprep.subr.bf16.mxu0 0
    %1348 = vmatpush1.bf16.msra.mxu0 0
    %1349 = vmatprep.subr.bf16.mxu0 0
    %1350 = vmatpush1.bf16.msra.mxu0 0
    %1351 = vmatprep.subr.bf16.mxu0 0
    %1352 = vmatpush1.bf16.msra.mxu0 0
    %1353 = vmatprep.subr.bf16.mxu0 0
    %1354 = vmatpush1.bf16.msra.mxu0 0
    %1355 = vmatprep.subr.bf16.mxu0 0
    %1356 = vmatpush1.bf16.msra.mxu0 0
    %1357 = vmatprep.subr.bf16.mxu0 0
    %1358 = vmatpush1.bf16.msra.mxu0 0
    %1359 = vmatprep.subr.bf16.mxu0 0
    %1360 = vmatpush1.bf16.msra.mxu0 0
    %1361 = vmatprep.mubr.bf16.mxu0 0
    %1362 = vmatmul.mubr.bf16.gmra.mrb[0].mxu0 %v654
    %v1363 = vpop.f32.mrb[0].mxu0
    %v1364 = vadd.f32 0.0, %v1363
    %v1365 = vpop.f32.mrb[0].mxu0
    %v1366 = vpop.f32.mrb[0].mxu0
    %v1367 = vadd.f32 0.0, %v1366
    %v1368 = vpop.f32.mrb[0].mxu0
    %1369 = vmatprep.mubr.bf16.mxu0 0
    %1370 = vmatmul.mubr.bf16.gmra.mrb[0].mxu0 %v655
    %v1371 = vpop.f32.mrb[0].mxu0
    %v1372 = vadd.f32 0.0, %v1371
    %v1373 = vpop.f32.mrb[0].mxu0
    %v1374 = vpop.f32.mrb[0].mxu0
    %v1375 = vadd.f32 0.0, %v1374
    %v1376 = vpop.f32.mrb[0].mxu0
    %1377 = vmatprep.mubr.bf16.mxu0 0
    %1378 = vmatmul.mubr.bf16.gmra.mrb[0].mxu0 %v656
    %v1379 = vpop.f32.mrb[0].mxu0
    %v1380 = vadd.f32 0.0, %v1379
    %v1381 = vpop.f32.mrb[0].mxu0
    %v1382 = vpop.f32.mrb[0].mxu0
    %v1383 = vadd.f32 0.0, %v1382
    %v1384 = vpop.f32.mrb[0].mxu0
    %1385 = vmatprep.mubr.bf16.mxu0 0
    %1386 = vmatmul.mubr.bf16.gmra.mrb[0].mxu0 %v657
    %v1387 = vpop.f32.mrb[0].mxu0
    %v1388 = vadd.f32 0.0, %v1387
    %v1389 = vpop.f32.mrb[0].mxu0
    %v1390 = vpop.f32.mrb[0].mxu0
    %v1391 = vadd.f32 0.0, %v1390
    %v1392 = vpop.f32.mrb[0].mxu0
    %1393 = vmatprep.mubr.bf16.mxu0 0
    %1394 = vmatmul.mubr.bf16.gmra.mrb[0].mxu0 %v658
    %v1395 = vpop.f32.mrb[0].mxu0
    %v1396 = vadd.f32 0.0, %v1395
    %v1397 = vpop.f32.mrb[0].mxu0
    %v1398 = vpop.f32.mrb[0].mxu0
    %v1399 = vadd.f32 0.0, %v1398
    %v1400 = vpop.f32.mrb[0].mxu0
    %1401 = vmatprep.mubr.bf16.mxu0 0
    %1402 = vmatmul.mubr.bf16.gmra.mrb[0].mxu0 %v659
    %v1403 = vpop.f32.mrb[0].mxu0
    %v1404 = vadd.f32 0.0, %v1403
    %v1405 = vpop.f32.mrb[0].mxu0
    %v1406 = vpop.f32.mrb[0].mxu0
    %v1407 = vadd.f32 0.0, %v1406
    %v1408 = vpop.f32.mrb[0].mxu0
    %1409 = vmatprep.mubr.bf16.mxu0 0
    %1410 = vmatmul.mubr.bf16.gmra.mrb[0].mxu0 %v660
    %v1411 = vpop.f32.mrb[0].mxu0
    %v1412 = vadd.f32 0.0, %v1411
    %v1413 = vpop.f32.mrb[0].mxu0
    %v1414 = vpop.f32.mrb[0].mxu0
    %v1415 = vadd.f32 0.0, %v1414
    %v1416 = vpop.f32.mrb[0].mxu0
    %1417 = vmatprep.mubr.bf16.mxu0 0
    %1418 = vmatmul.mubr.bf16.gmra.mrb[0].mxu0 %v661
    %v1419 = vpop.f32.mrb[0].mxu0
    %v1420 = vadd.f32 0.0, %v1419
    %v1421 = vpop.f32.mrb[0].mxu0
    %v1422 = vpop.f32.mrb[0].mxu0
    %v1423 = vadd.f32 0.0, %v1422
    %v1424 = vpop.f32.mrb[0].mxu0
    %1425 = vdwg.mxu0
    %v1426 = vpack.c.bf16 %v1367, %v1364
    %v1427 = vpack.c.bf16 %v1375, %v1372
    %v1428 = vpack.c.bf16 %v1383, %v1380
    %v1429 = vpack.c.bf16 %v1391, %v1388
    %v1430 = vpack.c.bf16 %v1399, %v1396
    %v1431 = vpack.c.bf16 %v1407, %v1404
    %v1432 = vpack.c.bf16 %v1415, %v1412
    %v1433 = vpack.c.bf16 %v1423, %v1420
    %1434 = vmatprep.subr.bf16.mxu0 0
    %1435 = vmatpush1.bf16.msra.mxu0 %v1426
    %1436 = vmatprep.subr.bf16.mxu0 0
    %1437 = vmatpush1.bf16.msra.mxu0 %v1427
    %1438 = vmatprep.subr.bf16.mxu0 0
    %1439 = vmatpush1.bf16.msra.mxu0 %v1428
    %1440 = vmatprep.subr.bf16.mxu0 0
    %1441 = vmatpush1.bf16.msra.mxu0 %v1429
    %1442 = vmatprep.subr.bf16.mxu0 0
    %1443 = vmatpush1.bf16.msra.mxu0 %v1430
    %1444 = vmatprep.subr.bf16.mxu0 0
    %1445 = vmatpush1.bf16.msra.mxu0 %v1431
    %1446 = vmatprep.subr.bf16.mxu0 0
    %1447 = vmatpush1.bf16.msra.mxu0 %v1432
    %1448 = vmatprep.subr.bf16.mxu0 0
    %1449 = vmatpush1.bf16.msra.mxu0 %v1433
    %1450 = vmatprep.subr.bf16.mxu0 0
    %1451 = vmatpush1.bf16.msra.mxu0 0
    %1452 = vmatprep.subr.bf16.mxu0 0
    %1453 = vmatpush1.bf16.msra.mxu0 0
    %1454 = vmatprep.subr.bf16.mxu0 0
    %1455 = vmatpush1.bf16.msra.mxu0 0
    %1456 = vmatprep.subr.bf16.mxu0 0
    %1457 = vmatpush1.bf16.msra.mxu0 0
    %1458 = vmatprep.subr.bf16.mxu0 0
    %1459 = vmatpush1.bf16.msra.mxu0 0
    %1460 = vmatprep.subr.bf16.mxu0 0
    %1461 = vmatpush1.bf16.msra.mxu0 0
    %1462 = vmatprep.subr.bf16.mxu0 0
    %1463 = vmatpush1.bf16.msra.mxu0 0
    %1464 = vmatprep.subr.bf16.mxu0 0
    %1465 = vmatpush1.bf16.msra.mxu0 0
    %1466 = vmatprep.mubr.bf16.mxu0 0
    %1467 = vmatmul.mubr.bf16.gmra.mrb[0].mxu0 %v654
    %v1468 = vpop.f32.mrb[0].mxu0
    %v1469 = vadd.f32 0.0, %v1468
    %v1470 = vpop.f32.mrb[0].mxu0
    %v1471 = vpop.f32.mrb[0].mxu0
    %v1472 = vadd.f32 0.0, %v1471
    %v1473 = vpop.f32.mrb[0].mxu0
    %1474 = vmatprep.mubr.bf16.mxu0 0
    %1475 = vmatmul.mubr.bf16.gmra.mrb[0].mxu0 %v655
    %v1476 = vpop.f32.mrb[0].mxu0
    %v1477 = vadd.f32 0.0, %v1476
    %v1478 = vpop.f32.mrb[0].mxu0
    %v1479 = vpop.f32.mrb[0].mxu0
    %v1480 = vadd.f32 0.0, %v1479
    %v1481 = vpop.f32.mrb[0].mxu0
    %1482 = vmatprep.mubr.bf16.mxu0 0
    %1483 = vmatmul.mubr.bf16.gmra.mrb[0].mxu0 %v656
    %v1484 = vpop.f32.mrb[0].mxu0
    %v1485 = vadd.f32 0.0, %v1484
    %v1486 = vpop.f32.mrb[0].mxu0
    %v1487 = vpop.f32.mrb[0].mxu0
    %v1488 = vadd.f32 0.0, %v1487
    %v1489 = vpop.f32.mrb[0].mxu0
    %1490 = vmatprep.mubr.bf16.mxu0 0
    %1491 = vmatmul.mubr.bf16.gmra.mrb[0].mxu0 %v657
    %v1492 = vpop.f32.mrb[0].mxu0
    %v1493 = vadd.f32 0.0, %v1492
    %v1494 = vpop.f32.mrb[0].mxu0
    %v1495 = vpop.f32.mrb[0].mxu0
    %v1496 = vadd.f32 0.0, %v1495
    %v1497 = vpop.f32.mrb[0].mxu0
    %1498 = vmatprep.mubr.bf16.mxu0 0
    %1499 = vmatmul.mubr.bf16.gmra.mrb[0].mxu0 %v658
    %v1500 = vpop.f32.mrb[0].mxu0
    %v1501 = vadd.f32 0.0, %v1500
    %v1502 = vpop.f32.mrb[0].mxu0
    %v1503 = vpop.f32.mrb[0].mxu0
    %v1504 = vadd.f32 0.0, %v1503
    %v1505 = vpop.f32.mrb[0].mxu0
    %1506 = vmatprep.mubr.bf16.mxu0 0
    %1507 = vmatmul.mubr.bf16.gmra.mrb[0].mxu0 %v659
    %v1508 = vpop.f32.mrb[0].mxu0
    %v1509 = vadd.f32 0.0, %v1508
    %v1510 = vpop.f32.mrb[0].mxu0
    %v1511 = vpop.f32.mrb[0].mxu0
    %v1512 = vadd.f32 0.0, %v1511
    %v1513 = vpop.f32.mrb[0].mxu0
    %1514 = vmatprep.mubr.bf16.mxu0 0
    %1515 = vmatmul.mubr.bf16.gmra.mrb[0].mxu0 %v660
    %v1516 = vpop.f32.mrb[0].mxu0
    %v1517 = vadd.f32 0.0, %v1516
    %v1518 = vpop.f32.mrb[0].mxu0
    %v1519 = vpop.f32.mrb[0].mxu0
    %v1520 = vadd.f32 0.0, %v1519
    %v1521 = vpop.f32.mrb[0].mxu0
    %1522 = vmatprep.mubr.bf16.mxu0 0
    %1523 = vmatmul.mubr.bf16.gmra.mrb[0].mxu0 %v661
    %v1524 = vpop.f32.mrb[0].mxu0
    %v1525 = vadd.f32 0.0, %v1524
    %v1526 = vpop.f32.mrb[0].mxu0
    %v1527 = vpop.f32.mrb[0].mxu0
    %v1528 = vadd.f32 0.0, %v1527
    %v1529 = vpop.f32.mrb[0].mxu0
    %1530 = vdwg.mxu0
    %v1531 = vmul.f32 %v1469, 2.0
    %v1532 = vmul.f32 %v1472, 2.0
    %v1533 = vmul.f32 %v1477, 2.0
    %v1534 = vmul.f32 %v1480, 2.0
    %v1535 = vmul.f32 %v1485, 2.0
    %v1536 = vmul.f32 %v1488, 2.0
    %v1537 = vmul.f32 %v1493, 2.0
    %v1538 = vmul.f32 %v1496, 2.0
    %v1539 = vmul.f32 %v1501, 2.0
    %v1540 = vmul.f32 %v1504, 2.0
    %v1541 = vmul.f32 %v1509, 2.0
    %v1542 = vmul.f32 %v1512, 2.0
    %v1543 = vmul.f32 %v1517, 2.0
    %v1544 = vmul.f32 %v1520, 2.0
    %v1545 = vmul.f32 %v1525, 2.0
    %v1546 = vmul.f32 %v1528, 2.0
    %v1547 = vsub.f32 %v1531, %v1305
    %v1548 = vsub.f32 %v1532, %v1306
    %v1549 = vsub.f32 %v1533, %v1307
    %v1550 = vsub.f32 %v1534, %v1308
    %v1551 = vsub.f32 %v1535, %v1309
    %v1552 = vsub.f32 %v1536, %v1310
    %v1553 = vsub.f32 %v1537, %v1311
    %v1554 = vsub.f32 %v1538, %v1312
    %v1555 = vsub.f32 %v1539, %v1313
    %v1556 = vsub.f32 %v1540, %v1314
    %v1557 = vsub.f32 %v1541, %v1315
    %v1558 = vsub.f32 %v1542, %v1316
    %v1559 = vsub.f32 %v1543, %v1317
    %v1560 = vsub.f32 %v1544, %v1318
    %v1561 = vsub.f32 %v1545, %v1319
    %v1562 = vsub.f32 %v1546, %v1320
    %v1563 = vpack.c.bf16 %v1548, %v1547
    %v1564 = vpack.c.bf16 %v1550, %v1549
    %v1565 = vpack.c.bf16 %v1552, %v1551
    %v1566 = vpack.c.bf16 %v1554, %v1553
    %v1567 = vpack.c.bf16 %v1556, %v1555
    %v1568 = vpack.c.bf16 %v1558, %v1557
    %v1569 = vpack.c.bf16 %v1560, %v1559
    %v1570 = vpack.c.bf16 %v1562, %v1561
    %v1571 = vld [vmem:[#allocation11] sm:$0xf]
    %v1572 = vld [vmem:[#allocation11 + $0x4] sm:$0xf]
    %v1573 = vld [vmem:[#allocation11 + $0x8] sm:$0xf]
    %v1574 = vld [vmem:[#allocation11 + $0xc] sm:$0xf]
    %v1575 = vld [vmem:[#allocation11 + $0x10] sm:$0xf]
    %v1576 = vld [vmem:[#allocation11 + $0x14] sm:$0xf]
    %v1577 = vld [vmem:[#allocation11 + $0x18] sm:$0xf]
    %v1578 = vld [vmem:[#allocation11 + $0x1c] sm:$0xf]
    %v1579 = vld [vmem:[#allocation11 + $0x20] sm:$0xf]
    %v1580 = vld [vmem:[#allocation11 + $0x24] sm:$0xf]
    %v1581 = vld [vmem:[#allocation11 + $0x28] sm:$0xf]
    %v1582 = vld [vmem:[#allocation11 + $0x2c] sm:$0xf]
    %v1583 = vld [vmem:[#allocation11 + $0x30] sm:$0xf]
    %v1584 = vld [vmem:[#allocation11 + $0x34] sm:$0xf]
    %v1585 = vld [vmem:[#allocation11 + $0x38] sm:$0xf]
    %v1586 = vld [vmem:[#allocation11 + $0x3c] sm:$0xf]
    %v1587 = vld [vmem:[#allocation11 + $0x40] sm:$0xf]
    %v1588 = vld [vmem:[#allocation11 + $0x44] sm:$0xf]
    %v1589 = vld [vmem:[#allocation11 + $0x48] sm:$0xf]
    %v1590 = vld [vmem:[#allocation11 + $0x4c] sm:$0xf]
    %v1591 = vld [vmem:[#allocation11 + $0x50] sm:$0xf]
    %v1592 = vld [vmem:[#allocation11 + $0x54] sm:$0xf]
    %v1593 = vld [vmem:[#allocation11 + $0x58] sm:$0xf]
    %v1594 = vld [vmem:[#allocation11 + $0x5c] sm:$0xf]
    %v1595 = vld [vmem:[#allocation11 + $0x60] sm:$0xf]
    %v1596 = vld [vmem:[#allocation11 + $0x64] sm:$0xf]
    %v1597 = vld [vmem:[#allocation11 + $0x68] sm:$0xf]
    %v1598 = vld [vmem:[#allocation11 + $0x6c] sm:$0xf]
    %v1599 = vld [vmem:[#allocation11 + $0x70] sm:$0xf]
    %v1600 = vld [vmem:[#allocation11 + $0x74] sm:$0xf]
    %v1601 = vld [vmem:[#allocation11 + $0x78] sm:$0xf]
    %v1602 = vld [vmem:[#allocation11 + $0x7c] sm:$0xf]
    %v1603 = vld [vmem:[#allocation11 + $0x80] sm:$0xf]
    %v1604 = vld [vmem:[#allocation11 + $0x84] sm:$0xf]
    %v1605 = vld [vmem:[#allocation11 + $0x88] sm:$0xf]
    %v1606 = vld [vmem:[#allocation11 + $0x8c] sm:$0xf]
    %v1607 = vld [vmem:[#allocation11 + $0x90] sm:$0xf]
    %v1608 = vld [vmem:[#allocation11 + $0x94] sm:$0xf]
    %v1609 = vld [vmem:[#allocation11 + $0x98] sm:$0xf]
    %v1610 = vld [vmem:[#allocation11 + $0x9c] sm:$0xf]
    %v1611 = vld [vmem:[#allocation11 + $0xa0] sm:$0xf]
    %v1612 = vld [vmem:[#allocation11 + $0xa4] sm:$0xf]
    %v1613 = vld [vmem:[#allocation11 + $0xa8] sm:$0xf]
    %v1614 = vld [vmem:[#allocation11 + $0xac] sm:$0xf]
    %v1615 = vld [vmem:[#allocation11 + $0xb0] sm:$0xf]
    %v1616 = vld [vmem:[#allocation11 + $0xb4] sm:$0xf]
    %v1617 = vld [vmem:[#allocation11 + $0xb8] sm:$0xf]
    %v1618 = vld [vmem:[#allocation11 + $0xbc] sm:$0xf]
    %v1619 = vld [vmem:[%s9] sm:$0x1]
    %v1621 = vlaneseq
    %v1622 = vshrl.u32 %v1621, 7
    %v1623 = vsub.s32 0, %v1622
    %v1624 = vrot.slane %v1619, %v1623
    %v1674 = vunpack.c.l.b16 %v1571
    %v1675 = vunpack.c.l.b16 %v1572
    %v1676 = vunpack.c.l.b16 %v1573
    %v1677 = vunpack.c.l.b16 %v1574
    %v1678 = vunpack.c.l.b16 %v1575
    %v1679 = vunpack.c.l.b16 %v1576
    %v1680 = vunpack.c.l.b16 %v1577
    %v1681 = vunpack.c.l.b16 %v1578
    %v1682 = vunpack.c.l.b16 %v1579
    %v1683 = vunpack.c.l.b16 %v1580
    %v1684 = vunpack.c.l.b16 %v1581
    %v1685 = vunpack.c.l.b16 %v1582
    %v1686 = vunpack.c.l.b16 %v1583
    %v1687 = vunpack.c.l.b16 %v1584
    %v1688 = vunpack.c.l.b16 %v1585
    %v1689 = vunpack.c.l.b16 %v1586
    %v1690 = vunpack.c.l.b16 %v1587
    %v1691 = vunpack.c.l.b16 %v1588
    %v1692 = vunpack.c.l.b16 %v1589
    %v1693 = vunpack.c.l.b16 %v1590
    %v1694 = vunpack.c.l.b16 %v1591
    %v1695 = vunpack.c.l.b16 %v1592
    %v1696 = vunpack.c.l.b16 %v1593
    %v1697 = vunpack.c.l.b16 %v1594
    %v1698 = vunpack.c.l.b16 %v1595
    %v1699 = vunpack.c.l.b16 %v1596
    %v1700 = vunpack.c.l.b16 %v1597
    %v1701 = vunpack.c.l.b16 %v1598
    %v1702 = vunpack.c.l.b16 %v1599
    %v1703 = vunpack.c.l.b16 %v1600
    %v1704 = vunpack.c.l.b16 %v1601
    %v1705 = vunpack.c.l.b16 %v1602
    %v1706 = vunpack.c.l.b16 %v1603
    %v1707 = vunpack.c.l.b16 %v1604
    %v1708 = vunpack.c.l.b16 %v1605
    %v1709 = vunpack.c.l.b16 %v1606
    %v1710 = vunpack.c.l.b16 %v1607
    %v1711 = vunpack.c.l.b16 %v1608
    %v1712 = vunpack.c.l.b16 %v1609
    %v1713 = vunpack.c.l.b16 %v1610
    %v1714 = vunpack.c.l.b16 %v1611
    %v1715 = vunpack.c.l.b16 %v1612
    %v1716 = vunpack.c.l.b16 %v1613
    %v1717 = vunpack.c.l.b16 %v1614
    %v1718 = vunpack.c.l.b16 %v1615
    %v1719 = vunpack.c.l.b16 %v1616
    %v1720 = vunpack.c.l.b16 %v1617
    %v1721 = vunpack.c.l.b16 %v1618
    %v1722 = vpack.c.b16 %v1675, %v1674
    %v1723 = vpack.c.b16 %v1677, %v1676
    %v1724 = vpack.c.b16 %v1679, %v1678
    %v1725 = vpack.c.b16 %v1681, %v1680
    %v1726 = vpack.c.b16 %v1683, %v1682
    %v1727 = vpack.c.b16 %v1685, %v1684
    %v1728 = vpack.c.b16 %v1687, %v1686
    %v1729 = vpack.c.b16 %v1689, %v1688
    %v1730 = vpack.c.b16 %v1691, %v1690
    %v1731 = vpack.c.b16 %v1693, %v1692
    %v1732 = vpack.c.b16 %v1695, %v1694
    %v1733 = vpack.c.b16 %v1697, %v1696
    %v1734 = vpack.c.b16 %v1699, %v1698
    %v1735 = vpack.c.b16 %v1701, %v1700
    %v1736 = vpack.c.b16 %v1703, %v1702
    %v1737 = vpack.c.b16 %v1705, %v1704
    %v1738 = vpack.c.b16 %v1707, %v1706
    %v1739 = vpack.c.b16 %v1709, %v1708
    %v1740 = vpack.c.b16 %v1711, %v1710
    %v1741 = vpack.c.b16 %v1713, %v1712
    %v1742 = vpack.c.b16 %v1715, %v1714
    %v1743 = vpack.c.b16 %v1717, %v1716
    %v1744 = vpack.c.b16 %v1719, %v1718
    %v1745 = vpack.c.b16 %v1721, %v1720
    %1770 = vmatprep.subr.bf16.mxu0 0
    %1771 = vmatpush1.bf16.msra.mxu0 %v1722
    %1772 = vmatprep.subr.bf16.mxu0 0
    %1773 = vmatpush1.bf16.msra.mxu0 %v1723
    %1774 = vmatprep.subr.bf16.mxu0 0
    %1775 = vmatpush1.bf16.msra.mxu0 %v1724
    %1776 = vmatprep.subr.bf16.mxu0 0
    %1777 = vmatpush1.bf16.msra.mxu0 %v1725
    %1778 = vmatprep.subr.bf16.mxu0 0
    %1779 = vmatpush1.bf16.msra.mxu0 %v1726
    %1780 = vmatprep.subr.bf16.mxu0 0
    %1781 = vmatpush1.bf16.msra.mxu0 %v1727
    %1782 = vmatprep.subr.bf16.mxu0 0
    %1783 = vmatpush1.bf16.msra.mxu0 %v1728
    %1784 = vmatprep.subr.bf16.mxu0 0
    %1785 = vmatpush1.bf16.msra.mxu0 %v1729
    %1786 = vmatprep.subr.bf16.mxu0 0
    %1787 = vmatpush1.bf16.msra.mxu0 %v1730
    %1788 = vmatprep.subr.bf16.mxu0 0
    %1789 = vmatpush1.bf16.msra.mxu0 %v1731
    %1790 = vmatprep.subr.bf16.mxu0 0
    %1791 = vmatpush1.bf16.msra.mxu0 %v1732
    %1792 = vmatprep.subr.bf16.mxu0 0
    %1793 = vmatpush1.bf16.msra.mxu0 %v1733
    %1794 = vmatprep.subr.bf16.mxu0 0
    %1795 = vmatpush1.bf16.msra.mxu0 %v1734
    %1796 = vmatprep.subr.bf16.mxu0 0
    %1797 = vmatpush1.bf16.msra.mxu0 %v1735
    %1798 = vmatprep.subr.bf16.mxu0 0
    %1799 = vmatpush1.bf16.msra.mxu0 %v1736
    %1800 = vmatprep.subr.bf16.mxu0 0
    %1801 = vmatpush1.bf16.msra.mxu0 %v1737
    %1802 = vmatprep.mubr.bf16.mxu0 %v1426
    %1803 = vmatmul.mubr.bf16.gmra.mrb[0].mxu0 %v1321
    %v1804 = vpop.f32.mrb[0].mxu0
    %v1805 = vadd.f32 %v1624, %v1804
    %v1806 = vpop.f32.mrb[0].mxu0
    %v1807 = vpop.f32.mrb[0].mxu0
    %v1808 = vadd.f32 %v1624, %v1807
    %v1809 = vpop.f32.mrb[0].mxu0
    %1810 = vmatprep.mubr.bf16.mxu0 %v1427
    %1811 = vmatmul.mubr.bf16.gmra.mrb[0].mxu0 %v1322
    %v1812 = vpop.f32.mrb[0].mxu0
    %v1813 = vadd.f32 %v1624, %v1812
    %v1814 = vpop.f32.mrb[0].mxu0
    %v1815 = vpop.f32.mrb[0].mxu0
    %v1816 = vadd.f32 %v1624, %v1815
    %v1817 = vpop.f32.mrb[0].mxu0
    %1818 = vmatprep.mubr.bf16.mxu0 %v1428
    %1819 = vmatmul.mubr.bf16.gmra.mrb[0].mxu0 %v1323
    %v1820 = vpop.f32.mrb[0].mxu0
    %v1821 = vadd.f32 %v1624, %v1820
    %v1822 = vpop.f32.mrb[0].mxu0
    %v1823 = vpop.f32.mrb[0].mxu0
    %v1824 = vadd.f32 %v1624, %v1823
    %v1825 = vpop.f32.mrb[0].mxu0
    %1826 = vmatprep.mubr.bf16.mxu0 %v1429
    %1827 = vmatmul.mubr.bf16.gmra.mrb[0].mxu0 %v1324
    %v1828 = vpop.f32.mrb[0].mxu0
    %v1829 = vadd.f32 %v1624, %v1828
    %v1830 = vpop.f32.mrb[0].mxu0
    %v1831 = vpop.f32.mrb[0].mxu0
    %v1832 = vadd.f32 %v1624, %v1831
    %v1833 = vpop.f32.mrb[0].mxu0
    %1834 = vmatprep.mubr.bf16.mxu0 %v1430
    %1835 = vmatmul.mubr.bf16.gmra.mrb[0].mxu0 %v1325
    %v1836 = vpop.f32.mrb[0].mxu0
    %v1837 = vadd.f32 %v1624, %v1836
    %v1838 = vpop.f32.mrb[0].mxu0
    %v1839 = vpop.f32.mrb[0].mxu0
    %v1840 = vadd.f32 %v1624, %v1839
    %v1841 = vpop.f32.mrb[0].mxu0
    %1842 = vmatprep.mubr.bf16.mxu0 %v1431
    %1843 = vmatmul.mubr.bf16.gmra.mrb[0].mxu0 %v1326
    %v1844 = vpop.f32.mrb[0].mxu0
    %v1845 = vadd.f32 %v1624, %v1844
    %v1846 = vpop.f32.mrb[0].mxu0
    %v1847 = vpop.f32.mrb[0].mxu0
    %v1848 = vadd.f32 %v1624, %v1847
    %v1849 = vpop.f32.mrb[0].mxu0
    %1850 = vmatprep.mubr.bf16.mxu0 %v1432
    %1851 = vmatmul.mubr.bf16.gmra.mrb[0].mxu0 %v1327
    %v1852 = vpop.f32.mrb[0].mxu0
    %v1853 = vadd.f32 %v1624, %v1852
    %v1854 = vpop.f32.mrb[0].mxu0
    %v1855 = vpop.f32.mrb[0].mxu0
    %v1856 = vadd.f32 %v1624, %v1855
    %v1857 = vpop.f32.mrb[0].mxu0
    %1858 = vmatprep.mubr.bf16.mxu0 %v1433
    %1859 = vmatmul.mubr.bf16.gmra.mrb[0].mxu0 %v1328
    %v1860 = vpop.f32.mrb[0].mxu0
    %v1861 = vadd.f32 %v1624, %v1860
    %v1862 = vpop.f32.mrb[0].mxu0
    %v1863 = vpop.f32.mrb[0].mxu0
    %v1864 = vadd.f32 %v1624, %v1863
    %v1865 = vpop.f32.mrb[0].mxu0
    %1866 = vdwg.mxu0
    %1867 = vmatprep.subr.bf16.mxu0 0
    %1868 = vmatpush1.bf16.msra.mxu0 %v1738
    %1869 = vmatprep.subr.bf16.mxu0 0
    %1870 = vmatpush1.bf16.msra.mxu0 %v1739
    %1871 = vmatprep.subr.bf16.mxu0 0
    %1872 = vmatpush1.bf16.msra.mxu0 %v1740
    %1873 = vmatprep.subr.bf16.mxu0 0
    %1874 = vmatpush1.bf16.msra.mxu0 %v1741
    %1875 = vmatprep.subr.bf16.mxu0 0
    %1876 = vmatpush1.bf16.msra.mxu0 %v1742
    %1877 = vmatprep.subr.bf16.mxu0 0
    %1878 = vmatpush1.bf16.msra.mxu0 %v1743
    %1879 = vmatprep.subr.bf16.mxu0 0
    %1880 = vmatpush1.bf16.msra.mxu0 %v1744
    %1881 = vmatprep.subr.bf16.mxu0 0
    %1882 = vmatpush1.bf16.msra.mxu0 %v1745
    %1883 = vmatprep.subr.bf16.mxu0 0
    %1884 = vmatpush1.bf16.msra.mxu0 0
    %1885 = vmatprep.subr.bf16.mxu0 0
    %1886 = vmatpush1.bf16.msra.mxu0 0
    %1887 = vmatprep.subr.bf16.mxu0 0
    %1888 = vmatpush1.bf16.msra.mxu0 0
    %1889 = vmatprep.subr.bf16.mxu0 0
    %1890 = vmatpush1.bf16.msra.mxu0 0
    %1891 = vmatprep.subr.bf16.mxu0 0
    %1892 = vmatpush1.bf16.msra.mxu0 0
    %1893 = vmatprep.subr.bf16.mxu0 0
    %1894 = vmatpush1.bf16.msra.mxu0 0
    %1895 = vmatprep.subr.bf16.mxu0 0
    %1896 = vmatpush1.bf16.msra.mxu0 0
    %1897 = vmatprep.subr.bf16.mxu0 0
    %1898 = vmatpush1.bf16.msra.mxu0 0
    %1899 = vmatprep.mubr.bf16.mxu0 0
    %1900 = vmatmul.mubr.bf16.gmra.mrb[0].mxu0 %v1563
    %v1901 = vpop.f32.mrb[0].mxu0
    %v1902 = vadd.f32 %v1805, %v1901
    %v1903 = vpop.f32.mrb[0].mxu0
    %v1904 = vpop.f32.mrb[0].mxu0
    %v1905 = vadd.f32 %v1808, %v1904
    %v1906 = vpop.f32.mrb[0].mxu0
    %1907 = vmatprep.mubr.bf16.mxu0 0
    %1908 = vmatmul.mubr.bf16.gmra.mrb[0].mxu0 %v1564
    %v1909 = vpop.f32.mrb[0].mxu0
    %v1910 = vadd.f32 %v1813, %v1909
    %v1911 = vpop.f32.mrb[0].mxu0
    %v1912 = vpop.f32.mrb[0].mxu0
    %v1913 = vadd.f32 %v1816, %v1912
    %v1914 = vpop.f32.mrb[0].mxu0
    %1915 = vmatprep.mubr.bf16.mxu0 0
    %1916 = vmatmul.mubr.bf16.gmra.mrb[0].mxu0 %v1565
    %v1917 = vpop.f32.mrb[0].mxu0
    %v1918 = vadd.f32 %v1821, %v1917
    %v1919 = vpop.f32.mrb[0].mxu0
    %v1920 = vpop.f32.mrb[0].mxu0
    %v1921 = vadd.f32 %v1824, %v1920
    %v1922 = vpop.f32.mrb[0].mxu0
    %1923 = vmatprep.mubr.bf16.mxu0 0
    %1924 = vmatmul.mubr.bf16.gmra.mrb[0].mxu0 %v1566
    %v1925 = vpop.f32.mrb[0].mxu0
    %v1926 = vadd.f32 %v1829, %v1925
    %v1927 = vpop.f32.mrb[0].mxu0
    %v1928 = vpop.f32.mrb[0].mxu0
    %v1929 = vadd.f32 %v1832, %v1928
    %v1930 = vpop.f32.mrb[0].mxu0
    %1931 = vmatprep.mubr.bf16.mxu0 0
    %1932 = vmatmul.mubr.bf16.gmra.mrb[0].mxu0 %v1567
    %v1933 = vpop.f32.mrb[0].mxu0
    %v1934 = vadd.f32 %v1837, %v1933
    %v1935 = vpop.f32.mrb[0].mxu0
    %v1936 = vpop.f32.mrb[0].mxu0
    %v1937 = vadd.f32 %v1840, %v1936
    %v1938 = vpop.f32.mrb[0].mxu0
    %1939 = vmatprep.mubr.bf16.mxu0 0
    %1940 = vmatmul.mubr.bf16.gmra.mrb[0].mxu0 %v1568
    %v1941 = vpop.f32.mrb[0].mxu0
    %v1942 = vadd.f32 %v1845, %v1941
    %v1943 = vpop.f32.mrb[0].mxu0
    %v1944 = vpop.f32.mrb[0].mxu0
    %v1945 = vadd.f32 %v1848, %v1944
    %v1946 = vpop.f32.mrb[0].mxu0
    %1947 = vmatprep.mubr.bf16.mxu0 0
    %1948 = vmatmul.mubr.bf16.gmra.mrb[0].mxu0 %v1569
    %v1949 = vpop.f32.mrb[0].mxu0
    %v1950 = vadd.f32 %v1853, %v1949
    %v1951 = vpop.f32.mrb[0].mxu0
    %v1952 = vpop.f32.mrb[0].mxu0
    %v1953 = vadd.f32 %v1856, %v1952
    %v1954 = vpop.f32.mrb[0].mxu0
    %1955 = vmatprep.mubr.bf16.mxu0 0
    %1956 = vmatmul.mubr.bf16.gmra.mrb[0].mxu0 %v1570
    %v1957 = vpop.f32.mrb[0].mxu0
    %v1958 = vadd.f32 %v1861, %v1957
    %v1959 = vpop.f32.mrb[0].mxu0
    %v1960 = vpop.f32.mrb[0].mxu0
    %v1961 = vadd.f32 %v1864, %v1960
    %v1962 = vpop.f32.mrb[0].mxu0
    %1963 = vdwg.mxu0
    %v1964 = vmax.f32 %v1902, 0.0
    %v1965 = vmax.f32 %v1905, 0.0
    %v1966 = vmax.f32 %v1910, 0.0
    %v1967 = vmax.f32 %v1913, 0.0
    %v1968 = vmax.f32 %v1918, 0.0
    %v1969 = vmax.f32 %v1921, 0.0
    %v1970 = vmax.f32 %v1926, 0.0
    %v1971 = vmax.f32 %v1929, 0.0
    %v1972 = vmax.f32 %v1934, 0.0
    %v1973 = vmax.f32 %v1937, 0.0
    %v1974 = vmax.f32 %v1942, 0.0
    %v1975 = vmax.f32 %v1945, 0.0
    %v1976 = vmax.f32 %v1950, 0.0
    %v1977 = vmax.f32 %v1953, 0.0
    %v1978 = vmax.f32 %v1958, 0.0
    %v1979 = vmax.f32 %v1961, 0.0
    %v1980 = vpack.c.bf16 %v1965, %v1964
    %v1981 = vpack.c.bf16 %v1967, %v1966
    %v1982 = vpack.c.bf16 %v1969, %v1968
    %v1983 = vpack.c.bf16 %v1971, %v1970
    %v1984 = vpack.c.bf16 %v1973, %v1972
    %v1985 = vpack.c.bf16 %v1975, %v1974
    %v1986 = vpack.c.bf16 %v1977, %v1976
    %v1987 = vpack.c.bf16 %v1979, %v1978
    %v1988 = vld [vmem:[#allocation13] sm:$0xf]
    %v1989 = vld [vmem:[#allocation13 + $0x4] sm:$0xf]
    %v1990 = vld [vmem:[#allocation13 + $0x8] sm:$0xf]
    %v1991 = vld [vmem:[#allocation13 + $0xc] sm:$0xf]
    %v1992 = vld [vmem:[#allocation13 + $0x10] sm:$0xf]
    %v1993 = vld [vmem:[#allocation13 + $0x14] sm:$0xf]
    %v1994 = vld [vmem:[#allocation13 + $0x18] sm:$0xf]
    %v1995 = vld [vmem:[#allocation13 + $0x1c] sm:$0xf]
    %v1996 = vld [vmem:[#allocation13 + $0x20] sm:$0xf]
    %v1997 = vld [vmem:[#allocation13 + $0x24] sm:$0xf]
    %v1998 = vld [vmem:[#allocation13 + $0x28] sm:$0xf]
    %v1999 = vld [vmem:[#allocation13 + $0x2c] sm:$0xf]
    %v2000 = vld [vmem:[#allocation13 + $0x30] sm:$0xf]
    %v2001 = vld [vmem:[#allocation13 + $0x34] sm:$0xf]
    %v2002 = vld [vmem:[#allocation13 + $0x38] sm:$0xf]
    %v2003 = vld [vmem:[#allocation13 + $0x3c] sm:$0xf]
    %v2004 = vld [vmem:[%s11] sm:$0x1]
    %v2006 = vlaneseq
    %v2007 = vshrl.u32 %v2006, 7
    %v2008 = vsub.s32 0, %v2007
    %v2009 = vrot.slane %v2004, %v2008
    %v2027 = vunpack.c.l.b16 %v1988
    %v2028 = vunpack.c.l.b16 %v1989
    %v2029 = vunpack.c.l.b16 %v1990
    %v2030 = vunpack.c.l.b16 %v1991
    %v2031 = vunpack.c.l.b16 %v1992
    %v2032 = vunpack.c.l.b16 %v1993
    %v2033 = vunpack.c.l.b16 %v1994
    %v2034 = vunpack.c.l.b16 %v1995
    %v2035 = vunpack.c.l.b16 %v1996
    %v2036 = vunpack.c.l.b16 %v1997
    %v2037 = vunpack.c.l.b16 %v1998
    %v2038 = vunpack.c.l.b16 %v1999
    %v2039 = vunpack.c.l.b16 %v2000
    %v2040 = vunpack.c.l.b16 %v2001
    %v2041 = vunpack.c.l.b16 %v2002
    %v2042 = vunpack.c.l.b16 %v2003
    %v2043 = vpack.c.b16 %v2028, %v2027
    %v2044 = vpack.c.b16 %v2030, %v2029
    %v2045 = vpack.c.b16 %v2032, %v2031
    %v2046 = vpack.c.b16 %v2034, %v2033
    %v2047 = vpack.c.b16 %v2036, %v2035
    %v2048 = vpack.c.b16 %v2038, %v2037
    %v2049 = vpack.c.b16 %v2040, %v2039
    %v2050 = vpack.c.b16 %v2042, %v2041
    %2059 = vmatprep.subr.bf16.mxu0 0
    %2060 = vmatpush1.bf16.msra.mxu0 %v2043
    %2061 = vmatprep.subr.bf16.mxu0 0
    %2062 = vmatpush1.bf16.msra.mxu0 %v2044
    %2063 = vmatprep.subr.bf16.mxu0 0
    %2064 = vmatpush1.bf16.msra.mxu0 %v2045
    %2065 = vmatprep.subr.bf16.mxu0 0
    %2066 = vmatpush1.bf16.msra.mxu0 %v2046
    %2067 = vmatprep.subr.bf16.mxu0 0
    %2068 = vmatpush1.bf16.msra.mxu0 %v2047
    %2069 = vmatprep.subr.bf16.mxu0 0
    %2070 = vmatpush1.bf16.msra.mxu0 %v2048
    %2071 = vmatprep.subr.bf16.mxu0 0
    %2072 = vmatpush1.bf16.msra.mxu0 %v2049
    %2073 = vmatprep.subr.bf16.mxu0 0
    %2074 = vmatpush1.bf16.msra.mxu0 %v2050
    %2075 = vmatprep.subr.bf16.mxu0 0
    %2076 = vmatpush1.bf16.msra.mxu0 0
    %2077 = vmatprep.subr.bf16.mxu0 0
    %2078 = vmatpush1.bf16.msra.mxu0 0
    %2079 = vmatprep.subr.bf16.mxu0 0
    %2080 = vmatpush1.bf16.msra.mxu0 0
    %2081 = vmatprep.subr.bf16.mxu0 0
    %2082 = vmatpush1.bf16.msra.mxu0 0
    %2083 = vmatprep.subr.bf16.mxu0 0
    %2084 = vmatpush1.bf16.msra.mxu0 0
    %2085 = vmatprep.subr.bf16.mxu0 0
    %2086 = vmatpush1.bf16.msra.mxu0 0
    %2087 = vmatprep.subr.bf16.mxu0 0
    %2088 = vmatpush1.bf16.msra.mxu0 0
    %2089 = vmatprep.subr.bf16.mxu0 0
    %2090 = vmatpush1.bf16.msra.mxu0 0
    %2091 = vmatprep.mubr.bf16.mxu0 0
    %2092 = vmatmul.mubr.bf16.gmra.mrb[0].mxu0 %v1980
    %v2093 = vpop.f32.mrb[0].mxu0
    %v2094 = vadd.f32 %v2009, %v2093
    %v2095 = vpop.f32.mrb[0].mxu0
    %v2096 = vpop.f32.mrb[0].mxu0
    %v2097 = vadd.f32 %v2009, %v2096
    %v2098 = vpop.f32.mrb[0].mxu0
    %2099 = vmatprep.mubr.bf16.mxu0 0
    %2100 = vmatmul.mubr.bf16.gmra.mrb[0].mxu0 %v1981
    %v2101 = vpop.f32.mrb[0].mxu0
    %v2102 = vadd.f32 %v2009, %v2101
    %v2103 = vpop.f32.mrb[0].mxu0
    %v2104 = vpop.f32.mrb[0].mxu0
    %v2105 = vadd.f32 %v2009, %v2104
    %v2106 = vpop.f32.mrb[0].mxu0
    %2107 = vmatprep.mubr.bf16.mxu0 0
    %2108 = vmatmul.mubr.bf16.gmra.mrb[0].mxu0 %v1982
    %v2109 = vpop.f32.mrb[0].mxu0
    %v2110 = vadd.f32 %v2009, %v2109
    %v2111 = vpop.f32.mrb[0].mxu0
    %v2112 = vpop.f32.mrb[0].mxu0
    %v2113 = vadd.f32 %v2009, %v2112
    %v2114 = vpop.f32.mrb[0].mxu0
    %2115 = vmatprep.mubr.bf16.mxu0 0
    %2116 = vmatmul.mubr.bf16.gmra.mrb[0].mxu0 %v1983
    %v2117 = vpop.f32.mrb[0].mxu0
    %v2118 = vadd.f32 %v2009, %v2117
    %v2119 = vpop.f32.mrb[0].mxu0
    %v2120 = vpop.f32.mrb[0].mxu0
    %v2121 = vadd.f32 %v2009, %v2120
    %v2122 = vpop.f32.mrb[0].mxu0
    %2123 = vmatprep.mubr.bf16.mxu0 0
    %2124 = vmatmul.mubr.bf16.gmra.mrb[0].mxu0 %v1984
    %v2125 = vpop.f32.mrb[0].mxu0
    %v2126 = vadd.f32 %v2009, %v2125
    %v2127 = vpop.f32.mrb[0].mxu0
    %v2128 = vpop.f32.mrb[0].mxu0
    %v2129 = vadd.f32 %v2009, %v2128
    %v2130 = vpop.f32.mrb[0].mxu0
    %2131 = vmatprep.mubr.bf16.mxu0 0
    %2132 = vmatmul.mubr.bf16.gmra.mrb[0].mxu0 %v1985
    %v2133 = vpop.f32.mrb[0].mxu0
    %v2134 = vadd.f32 %v2009, %v2133
    %v2135 = vpop.f32.mrb[0].mxu0
    %v2136 = vpop.f32.mrb[0].mxu0
    %v2137 = vadd.f32 %v2009, %v2136
    %v2138 = vpop.f32.mrb[0].mxu0
    %2139 = vmatprep.mubr.bf16.mxu0 0
    %2140 = vmatmul.mubr.bf16.gmra.mrb[0].mxu0 %v1986
    %v2141 = vpop.f32.mrb[0].mxu0
    %v2142 = vadd.f32 %v2009, %v2141
    %v2143 = vpop.f32.mrb[0].mxu0
    %v2144 = vpop.f32.mrb[0].mxu0
    %v2145 = vadd.f32 %v2009, %v2144
    %v2146 = vpop.f32.mrb[0].mxu0
    %2147 = vmatprep.mubr.bf16.mxu0 0
    %2148 = vmatmul.mubr.bf16.gmra.mrb[0].mxu0 %v1987
    %v2149 = vpop.f32.mrb[0].mxu0
    %v2150 = vadd.f32 %v2009, %v2149
    %v2151 = vpop.f32.mrb[0].mxu0
    %v2152 = vpop.f32.mrb[0].mxu0
    %v2153 = vadd.f32 %v2009, %v2152
    %v2154 = vpop.f32.mrb[0].mxu0
    %2155 = vdwg.mxu0
    %v2156 = vmax.f32 %v2094, 0.0
    %v2157 = vmax.f32 %v2097, 0.0
    %v2158 = vmax.f32 %v2102, 0.0
    %v2159 = vmax.f32 %v2105, 0.0
    %v2160 = vmax.f32 %v2110, 0.0
    %v2161 = vmax.f32 %v2113, 0.0
    %v2162 = vmax.f32 %v2118, 0.0
    %v2163 = vmax.f32 %v2121, 0.0
    %v2164 = vmax.f32 %v2126, 0.0
    %v2165 = vmax.f32 %v2129, 0.0
    %v2166 = vmax.f32 %v2134, 0.0
    %v2167 = vmax.f32 %v2137, 0.0
    %v2168 = vmax.f32 %v2142, 0.0
    %v2169 = vmax.f32 %v2145, 0.0
    %v2170 = vmax.f32 %v2150, 0.0
    %v2171 = vmax.f32 %v2153, 0.0
    %v2172 = vpack.c.bf16 %v2157, %v2156
    %v2173 = vpack.c.bf16 %v2159, %v2158
    %v2174 = vpack.c.bf16 %v2161, %v2160
    %v2175 = vpack.c.bf16 %v2163, %v2162
    %v2176 = vpack.c.bf16 %v2165, %v2164
    %v2177 = vpack.c.bf16 %v2167, %v2166
    %v2178 = vpack.c.bf16 %v2169, %v2168
    %v2179 = vpack.c.bf16 %v2171, %v2170
    %v2180 = vld [vmem:[#allocation14] sm:$0xf]
    %v2181 = vld [vmem:[#allocation14 + $0x4] sm:$0xf]
    %v2182 = vld [vmem:[#allocation14 + $0x8] sm:$0xf]
    %v2183 = vld [vmem:[#allocation14 + $0xc] sm:$0xf]
    %v2184 = vld [vmem:[#allocation14 + $0x10] sm:$0xf]
    %v2185 = vld [vmem:[#allocation14 + $0x14] sm:$0xf]
    %v2186 = vld [vmem:[#allocation14 + $0x18] sm:$0xf]
    %v2187 = vld [vmem:[#allocation14 + $0x1c] sm:$0xf]
    %v2188 = vld [vmem:[#allocation14 + $0x20] sm:$0xf]
    %v2189 = vld [vmem:[#allocation14 + $0x24] sm:$0xf]
    %v2190 = vld [vmem:[#allocation14 + $0x28] sm:$0xf]
    %v2191 = vld [vmem:[#allocation14 + $0x2c] sm:$0xf]
    %v2192 = vld [vmem:[#allocation14 + $0x30] sm:$0xf]
    %v2193 = vld [vmem:[#allocation14 + $0x34] sm:$0xf]
    %v2194 = vld [vmem:[#allocation14 + $0x38] sm:$0xf]
    %v2195 = vld [vmem:[#allocation14 + $0x3c] sm:$0xf]
    %v2196 = vld [vmem:[%s13] sm:$0x1]
    %v2198 = vlaneseq
    %v2199 = vshrl.u32 %v2198, 7
    %v2200 = vsub.s32 0, %v2199
    %v2201 = vrot.slane %v2196, %v2200
    %v2219 = vunpack.c.l.b16 %v2180
    %v2220 = vunpack.c.l.b16 %v2181
    %v2221 = vunpack.c.l.b16 %v2182
    %v2222 = vunpack.c.l.b16 %v2183
    %v2223 = vunpack.c.l.b16 %v2184
    %v2224 = vunpack.c.l.b16 %v2185
    %v2225 = vunpack.c.l.b16 %v2186
    %v2226 = vunpack.c.l.b16 %v2187
    %v2227 = vunpack.c.l.b16 %v2188
    %v2228 = vunpack.c.l.b16 %v2189
    %v2229 = vunpack.c.l.b16 %v2190
    %v2230 = vunpack.c.l.b16 %v2191
    %v2231 = vunpack.c.l.b16 %v2192
    %v2232 = vunpack.c.l.b16 %v2193
    %v2233 = vunpack.c.l.b16 %v2194
    %v2234 = vunpack.c.l.b16 %v2195
    %v2235 = vpack.c.b16 %v2220, %v2219
    %v2236 = vpack.c.b16 %v2222, %v2221
    %v2237 = vpack.c.b16 %v2224, %v2223
    %v2238 = vpack.c.b16 %v2226, %v2225
    %v2239 = vpack.c.b16 %v2228, %v2227
    %v2240 = vpack.c.b16 %v2230, %v2229
    %v2241 = vpack.c.b16 %v2232, %v2231
    %v2242 = vpack.c.b16 %v2234, %v2233
    %2251 = vmatprep.subr.bf16.mxu0 0
    %2252 = vmatpush1.bf16.msra.mxu0 %v2235
    %2253 = vmatprep.subr.bf16.mxu0 0
    %2254 = vmatpush1.bf16.msra.mxu0 %v2236
    %2255 = vmatprep.subr.bf16.mxu0 0
    %2256 = vmatpush1.bf16.msra.mxu0 %v2237
    %2257 = vmatprep.subr.bf16.mxu0 0
    %2258 = vmatpush1.bf16.msra.mxu0 %v2238
    %2259 = vmatprep.subr.bf16.mxu0 0
    %2260 = vmatpush1.bf16.msra.mxu0 %v2239
    %2261 = vmatprep.subr.bf16.mxu0 0
    %2262 = vmatpush1.bf16.msra.mxu0 %v2240
    %2263 = vmatprep.subr.bf16.mxu0 0
    %2264 = vmatpush1.bf16.msra.mxu0 %v2241
    %2265 = vmatprep.subr.bf16.mxu0 0
    %2266 = vmatpush1.bf16.msra.mxu0 %v2242
    %2267 = vmatprep.subr.bf16.mxu0 0
    %2268 = vmatpush1.bf16.msra.mxu0 0
    %2269 = vmatprep.subr.bf16.mxu0 0
    %2270 = vmatpush1.bf16.msra.mxu0 0
    %2271 = vmatprep.subr.bf16.mxu0 0
    %2272 = vmatpush1.bf16.msra.mxu0 0
    %2273 = vmatprep.subr.bf16.mxu0 0
    %2274 = vmatpush1.bf16.msra.mxu0 0
    %2275 = vmatprep.subr.bf16.mxu0 0
    %2276 = vmatpush1.bf16.msra.mxu0 0
    %2277 = vmatprep.subr.bf16.mxu0 0
    %2278 = vmatpush1.bf16.msra.mxu0 0
    %2279 = vmatprep.subr.bf16.mxu0 0
    %2280 = vmatpush1.bf16.msra.mxu0 0
    %2281 = vmatprep.subr.bf16.mxu0 0
    %2282 = vmatpush1.bf16.msra.mxu0 0
    %2283 = vmatprep.mubr.bf16.mxu0 0
    %2284 = vmatmul.mubr.bf16.gmra.mrb[0].mxu0 %v2172
    %v2285 = vpop.f32.mrb[0].mxu0
    %v2286 = vadd.f32 %v2201, %v2285
    %v2287 = vpop.f32.mrb[0].mxu0
    %v2288 = vpop.f32.mrb[0].mxu0
    %v2289 = vadd.f32 %v2201, %v2288
    %v2290 = vpop.f32.mrb[0].mxu0
    %2291 = vmatprep.mubr.bf16.mxu0 0
    %2292 = vmatmul.mubr.bf16.gmra.mrb[0].mxu0 %v2173
    %v2293 = vpop.f32.mrb[0].mxu0
    %v2294 = vadd.f32 %v2201, %v2293
    %v2295 = vpop.f32.mrb[0].mxu0
    %v2296 = vpop.f32.mrb[0].mxu0
    %v2297 = vadd.f32 %v2201, %v2296
    %v2298 = vpop.f32.mrb[0].mxu0
    %2299 = vmatprep.mubr.bf16.mxu0 0
    %2300 = vmatmul.mubr.bf16.gmra.mrb[0].mxu0 %v2174
    %v2301 = vpop.f32.mrb[0].mxu0
    %v2302 = vadd.f32 %v2201, %v2301
    %v2303 = vpop.f32.mrb[0].mxu0
    %v2304 = vpop.f32.mrb[0].mxu0
    %v2305 = vadd.f32 %v2201, %v2304
    %v2306 = vpop.f32.mrb[0].mxu0
    %2307 = vmatprep.mubr.bf16.mxu0 0
    %2308 = vmatmul.mubr.bf16.gmra.mrb[0].mxu0 %v2175
    %v2309 = vpop.f32.mrb[0].mxu0
    %v2310 = vadd.f32 %v2201, %v2309
    %v2311 = vpop.f32.mrb[0].mxu0
    %v2312 = vpop.f32.mrb[0].mxu0
    %v2313 = vadd.f32 %v2201, %v2312
    %v2314 = vpop.f32.mrb[0].mxu0
    %2315 = vmatprep.mubr.bf16.mxu0 0
    %2316 = vmatmul.mubr.bf16.gmra.mrb[0].mxu0 %v2176
    %v2317 = vpop.f32.mrb[0].mxu0
    %v2318 = vadd.f32 %v2201, %v2317
    %v2319 = vpop.f32.mrb[0].mxu0
    %v2320 = vpop.f32.mrb[0].mxu0
    %v2321 = vadd.f32 %v2201, %v2320
    %v2322 = vpop.f32.mrb[0].mxu0
    %2323 = vmatprep.mubr.bf16.mxu0 0
    %2324 = vmatmul.mubr.bf16.gmra.mrb[0].mxu0 %v2177
    %v2325 = vpop.f32.mrb[0].mxu0
    %v2326 = vadd.f32 %v2201, %v2325
    %v2327 = vpop.f32.mrb[0].mxu0
    %v2328 = vpop.f32.mrb[0].mxu0
    %v2329 = vadd.f32 %v2201, %v2328
    %v2330 = vpop.f32.mrb[0].mxu0
    %2331 = vmatprep.mubr.bf16.mxu0 0
    %2332 = vmatmul.mubr.bf16.gmra.mrb[0].mxu0 %v2178
    %v2333 = vpop.f32.mrb[0].mxu0
    %v2334 = vadd.f32 %v2201, %v2333
    %v2335 = vpop.f32.mrb[0].mxu0
    %v2336 = vpop.f32.mrb[0].mxu0
    %v2337 = vadd.f32 %v2201, %v2336
    %v2338 = vpop.f32.mrb[0].mxu0
    %2339 = vmatprep.mubr.bf16.mxu0 0
    %2340 = vmatmul.mubr.bf16.gmra.mrb[0].mxu0 %v2179
    %v2341 = vpop.f32.mrb[0].mxu0
    %v2342 = vadd.f32 %v2201, %v2341
    %v2343 = vpop.f32.mrb[0].mxu0
    %v2344 = vpop.f32.mrb[0].mxu0
    %v2345 = vadd.f32 %v2201, %v2344
    %v2346 = vpop.f32.mrb[0].mxu0
    %2347 = vdwg.mxu0
    %2348 = vst [vmem:[#allocation16] sm:$0xff] %v2286
    %2349 = vst [vmem:[#allocation16 + $0x8] sm:$0xff] %v2289
    %2350 = vst [vmem:[#allocation16 + $0x10] sm:$0xff] %v2294
    %2351 = vst [vmem:[#allocation16 + $0x18] sm:$0xff] %v2297
    %2352 = vst [vmem:[#allocation16 + $0x20] sm:$0xff] %v2302
    %2353 = vst [vmem:[#allocation16 + $0x28] sm:$0xff] %v2305
    %2354 = vst [vmem:[#allocation16 + $0x30] sm:$0xff] %v2310
    %2355 = vst [vmem:[#allocation16 + $0x38] sm:$0xff] %v2313
    %2356 = vst [vmem:[#allocation16 + $0x40] sm:$0xff] %v2318
    %2357 = vst [vmem:[#allocation16 + $0x48] sm:$0xff] %v2321
    %2358 = vst [vmem:[#allocation16 + $0x50] sm:$0xff] %v2326
    %2359 = vst [vmem:[#allocation16 + $0x58] sm:$0xff] %v2329
    %2360 = vst [vmem:[#allocation16 + $0x60] sm:$0xff] %v2334
    %2361 = vst [vmem:[#allocation16 + $0x68] sm:$0xff] %v2337
    %2362 = vst [vmem:[#allocation16 + $0x70] sm:$0xff] %v2342
    %2363 = vst [vmem:[#allocation16 + $0x78] sm:$0xff] %v2345
    // Predicated region
    $region90: #{tpu_custom_call.1} parent=1 // pred_check
      _
    $region91: #{tpu_custom_call.1} parent=1 // pred_check_branch
      %2365 = sbr.rel (0) target = $region93
    $region92: #{tpu_custom_call.1} parent=1 // pred_region
      %s2367 = ssub.s32 2048, 2048
      %2368 = vsyncadd [#allocation4], %s2367
      %s2369 = sshll.u32 [#allocation16], 4
      %s2370 = int_to_ptr.vmem [resolvable:$true] %s2369
      %2375 = dma.vmem_to_hbm [thread:$0]  %s2370, 2048, %s14, [#allocation4], 128, 128, 8
    $region93: #{tpu_custom_call.1} parent=1 // pred_fallthru
      _
    // Predicated region
    $region94: #{tpu_custom_call.1} parent=1 // pred_check
      _
    $region95: #{tpu_custom_call.1} parent=1 // pred_check_branch
      %2377 = sbr.rel (0) target = $region97
    $region96: #{tpu_custom_call.1} parent=1 // pred_region
      %2378 = dma.done [#allocation4], 2048
    $region97: #{tpu_custom_call.1} parent=1 // pred_fallthru
      _
    %2379 = vsyncpa [#allocation3], 1
    %2380 = vsyncpa [#allocation6], 1
    %2381 = vsyncpa [#allocation9], 1
    %2382 = vsyncpa [#allocation12], 1
    %2383 = vsyncpa [#allocation15], 1
    %2384 = vsyncpa [#allocation4], 1

</llo_original>
